<compile_context>
chip_gen: v7x
topology: tpu7x:2x2x1
jax: 0.10.0
libtpu: 0.0.40
codegen_flags: <defaults>
</compile_context>

<pallas_src>
import functools

import jax
import jax.numpy as jnp
from jax.experimental import pallas as pl
from jax.experimental.pallas import tpu as pltpu

_LANE = 128


def _round_up(x, m):
    return ((x + m - 1) // m) * m


def _gn_kernel(nodes_ref, edges_ref, u_ref, src_ref, dst_ref, batch_ref,
               bdst_ref, we_ref, be_ref, wn_ref, bn_ref, wu_ref, bu_ref,
               nodes_out_ref, edges_out_ref, u_out_ref, *, num_layers):
    f32 = jnp.float32
    dot = functools.partial(jnp.dot, preferred_element_type=f32)

    nodes0 = nodes_ref[...]                       # (N_v, D_v)
    edges0 = edges_ref[...]                       # (N_e, D_e)
    u0 = u_ref[...]                               # (N_b, D_u)
    src = src_ref[...]                            # (N_e, 1) int32
    dst = dst_ref[...]                            # (N_e, 1) int32
    batch = batch_ref[...]                        # (N_v, 1) int32
    bdst = bdst_ref[...]                          # (N_e, 1) int32 = batch[dst]

    N_v = nodes0.shape[0]
    N_e = edges0.shape[0]
    N_b = u0.shape[0]

    # One-hot gather/scatter matrices (exact 0/1), built ONCE and reused for
    # every layer.  Gathers and segment-sums then run on the MXU.
    iota_v = jax.lax.broadcasted_iota(jnp.int32, (N_e, N_v), 1)
    s_src = (src == iota_v).astype(f32)           # (N_e, N_v) nodes[src] gather
    s_dst = (dst == iota_v).astype(f32)           # (N_e, N_v) gather + scatter-add
    b_oh = (batch ==
            jax.lax.broadcasted_iota(jnp.int32, (N_v, N_b), 1)).astype(f32)
    bd_oh = (bdst ==
             jax.lax.broadcasted_iota(jnp.int32, (N_e, N_b), 1)).astype(f32)

    # Loop-invariant transposes hoisted out of the layer loop (XLU work once).
    s_dst_t = s_dst.T                             # (N_v, N_e)
    b_oh_t = b_oh.T                               # (N_b, N_v)

    # Weights resident in VMEM across all layers.
    we = we_ref[...]; be = be_ref[...]
    wn = wn_ref[...]; bn = bn_ref[...]
    wu = wu_ref[...]; bu = bu_ref[...]

    def layer(_, carry):
        nodes, edges, u = carry

        # ---- edge model: single wide-K matmul --------------------------------
        x_src = dot(s_src, nodes)                 # (N_e, D_v)
        x_dst = dot(s_dst, nodes)                 # (N_e, D_v)
        u_edge = dot(bd_oh, u)                    # (N_e, D_u)  u[batch[dst]]
        e_in = jnp.concatenate([x_src, x_dst, edges, u_edge], axis=1)
        new_edges = jnp.maximum(dot(e_in, we) + be, 0.0)      # (N_e, D_e)

        # ---- node model ------------------------------------------------------
        edge_agg = dot(s_dst_t, new_edges)        # (N_v, D_e) segment-sum over dst
        u_node = dot(b_oh, u)                     # (N_v, D_u) u[batch]
        n_in = jnp.concatenate([nodes, edge_agg, u_node], axis=1)
        new_nodes = jnp.maximum(dot(n_in, wn) + bn, 0.0)      # (N_v, D_v)

        # ---- global model ------------------------------------------------------
        # edge_pool over graphs == b_oh.T @ edge_agg (sum over edges in graph g
        # equals sum over nodes in g of their incoming-edge sums).
        node_pool = dot(b_oh_t, new_nodes)        # (N_b, D_v)
        edge_pool = dot(b_oh_t, edge_agg)         # (N_b, D_e)
        u_in = jnp.concatenate([node_pool, edge_pool, u], axis=1)
        new_u = jnp.maximum(dot(u_in, wu) + bu, 0.0)          # (N_b, D_u)

        return new_nodes, new_edges, new_u

    nodes, edges, u = jax.lax.fori_loop(0, num_layers, layer,
                                        (nodes0, edges0, u0), unroll=True)

    nodes_out_ref[...] = nodes.astype(nodes_out_ref.dtype)
    edges_out_ref[...] = edges.astype(edges_out_ref.dtype)
    u_out_ref[...] = u.astype(u_out_ref.dtype)


def _pad_cols(x, d_pad):
    d = x.shape[1]
    if d == d_pad:
        return x.astype(jnp.float32)
    return jnp.pad(x.astype(jnp.float32), ((0, 0), (0, d_pad - d)))


def _pad_weight(w, in_dims, in_dims_pad, d_out, d_out_pad):
    """Re-place the stacked blocks of a (sum(in_dims), d_out) weight into the
    zero-padded (sum(in_dims_pad), d_out_pad) layout used inside the kernel."""
    w = w.astype(jnp.float32)
    wp = jnp.zeros((sum(in_dims_pad), d_out_pad), jnp.float32)
    r, rp = 0, 0
    for d, dp in zip(in_dims, in_dims_pad):
        wp = wp.at[rp:rp + d, :d_out].set(w[r:r + d, :])
        r += d
        rp += dp
    return wp


@functools.partial(jax.jit, static_argnames=("num_layers",))
def _gn_forward(nodes, edge_index, edges, u, batch, params, num_layers):
    N_v, d_v = nodes.shape
    N_e = edge_index.shape[1]
    d_e = edges.shape[1]
    N_b, d_u = u.shape

    D_v = _round_up(d_v, _LANE)
    D_e = _round_up(d_e, _LANE)
    D_u = _round_up(d_u, _LANE)

    batch_i = batch.astype(jnp.int32)
    src = edge_index[0].reshape(N_e, 1).astype(jnp.int32)
    dst = edge_index[1].reshape(N_e, 1).astype(jnp.int32)
    batch_col = batch_i.reshape(N_v, 1)
    batch_dst = batch_i[edge_index[1]].reshape(N_e, 1)   # graph id of each edge

    nodes_p = _pad_cols(nodes, D_v)
    edges_p = _pad_cols(edges, D_e)
    u_p = _pad_cols(u, D_u)

    we_p = _pad_weight(params["we"], (d_v, d_v, d_e, d_u),
                       (D_v, D_v, D_e, D_u), d_e, D_e)
    wn_p = _pad_weight(params["wn"], (d_v, d_e, d_u),
                       (D_v, D_e, D_u), d_v, D_v)
    wu_p = _pad_weight(params["wu"], (d_v, d_e, d_u),
                       (D_v, D_e, D_u), d_u, D_u)
    be_p = _pad_cols(params["be"], D_e)
    bn_p = _pad_cols(params["bn"], D_v)
    bu_p = _pad_cols(params["bu"], D_u)

    vmem = pl.BlockSpec(memory_space=pltpu.MemorySpace.VMEM)
    kernel = functools.partial(_gn_kernel, num_layers=num_layers)
    nodes_o, edges_o, u_o = pl.pallas_call(
        kernel,
        out_shape=(jax.ShapeDtypeStruct((N_v, D_v), jnp.float32),
                   jax.ShapeDtypeStruct((N_e, D_e), jnp.float32),
                   jax.ShapeDtypeStruct((N_b, D_u), jnp.float32)),
        in_specs=[vmem] * 13,
        out_specs=(vmem, vmem, vmem),
        compiler_params=pltpu.CompilerParams(
            vmem_limit_bytes=32 * 1024 * 1024),   # explicit: safe on v5e/v6e/v7x
    )(nodes_p, edges_p, u_p, src, dst, batch_col, batch_dst,
      we_p, be_p, wn_p, bn_p, wu_p, bu_p)

    return (nodes_o[:, :d_v].astype(nodes.dtype),
            edge_index,
            edges_o[:, :d_e].astype(edges.dtype),
            u_o[:, :d_u].astype(u.dtype),
            batch)


def graph_network_pallas(nodes, edge_index, edges, u, batch, params,
                         num_layers=1):
    """Mirrors GraphNetwork.forward; returns (nodes, edge_index, edges, u, batch)."""
    if batch is None:
        batch = jnp.zeros((nodes.shape[0],), dtype=jnp.int32)
    return _gn_forward(nodes, edge_index, edges, u, batch, params, num_layers)


def graph_network_ref(nodes, edge_index, edges, u, batch, params,
                      num_layers=1):
    """Pure-JAX reference with identical semantics (for validation)."""
    src, dst = edge_index[0], edge_index[1]
    N_v = nodes.shape[0]
    N_b = u.shape[0]
    for _ in range(num_layers):
        x_src, x_dst = nodes[src], nodes[dst]
        u_node = u[batch]
        u_edge = u_node[dst]
        e_in = jnp.concatenate([x_src, x_dst, edges, u_edge], axis=1)
        edges = jax.nn.relu(e_in @ params["we"] + params["be"])

        edge_agg = jax.ops.segment_sum(edges, dst, num_segments=N_v)
        n_in = jnp.concatenate([nodes, edge_agg, u_node], axis=1)
        nodes = jax.nn.relu(n_in @ params["wn"] + params["bn"])

        node_pool = jax.ops.segment_sum(nodes, batch, num_segments=N_b)
        edge_pool = jax.ops.segment_sum(edges, batch[dst], num_segments=N_b)
        u_in = jnp.concatenate([node_pool, edge_pool, u], axis=1)
        u = jax.nn.relu(u_in @ params["wu"] + params["bu"])
    return nodes, edge_index, edges, u, batch


def init_params(key, d_v, d_e, d_u):
    ks = jax.random.split(key, 6)
    scale = 0.1
    return {
        "we": scale * jax.random.normal(ks[0], (2 * d_v + d_e + d_u, d_e), jnp.float32),
        "be": scale * jax.random.normal(ks[1], (1, d_e), jnp.float32),
        "wn": scale * jax.random.normal(ks[2], (d_v + d_e + d_u, d_v), jnp.float32),
        "bn": scale * jax.random.normal(ks[3], (1, d_v), jnp.float32),
        "wu": scale * jax.random.normal(ks[4], (d_v + d_e + d_u, d_u), jnp.float32),
        "bu": scale * jax.random.normal(ks[5], (1, d_u), jnp.float32),
    }


if __name__ == "__main__":
    key = jax.random.PRNGKey(0)
    k_n, k_e, k_u, k_ei, k_p = jax.random.split(key, 5)

    N_v, N_e, N_b = 16, 32, 2
    d_v, d_e, d_u = 8, 8, 8
    num_layers = 2

    nodes = jax.random.normal(k_n, (N_v, d_v), jnp.float32)
    edges = jax.random.normal(k_e, (N_e, d_e), jnp.float32)
    u = jax.random.normal(k_u, (N_b, d_u), jnp.float32)
    edge_index = jax.random.randint(k_ei, (2, N_e), 0, N_v, jnp.int32)
    batch = jnp.concatenate([jnp.zeros((N_v // 2,), jnp.int32),
                             jnp.ones((N_v - N_v // 2,), jnp.int32)])
    params = init_params(k_p, d_v, d_e, d_u)

    out = graph_network_pallas(nodes, edge_index, edges, u, batch, params,
                               num_layers=num_layers)
    out = jax.block_until_ready(out)

    ref = graph_network_ref(nodes, edge_index, edges, u, batch, params,
                            num_layers=num_layers)

    assert jnp.allclose(out[0], ref[0], atol=1e-4, rtol=1e-4)   # nodes
    assert jnp.allclose(out[2], ref[2], atol=1e-4, rtol=1e-4)   # edges
    assert jnp.allclose(out[3], ref[3], atol=1e-4, rtol=1e-4)   # u
    assert jnp.array_equal(out[1], edge_index)                  # edge_index pass-through
    assert jnp.array_equal(out[4], batch)                       # batch pass-through

    print("KERNEL_OK")
</pallas_src>

<mosaic_0001>
module attributes {stable_mosaic.version = 11 : i64} {
  func.func @_gn_kernel(%arg0: memref<16x128xf32, #tpu.memory_space<vmem>>, %arg1: memref<32x128xf32, #tpu.memory_space<vmem>>, %arg2: memref<2x128xf32, #tpu.memory_space<vmem>>, %arg3: memref<32x1xi32, #tpu.memory_space<vmem>>, %arg4: memref<32x1xi32, #tpu.memory_space<vmem>>, %arg5: memref<16x1xi32, #tpu.memory_space<vmem>>, %arg6: memref<32x1xi32, #tpu.memory_space<vmem>>, %arg7: memref<512x128xf32, #tpu.memory_space<vmem>>, %arg8: memref<1x128xf32, #tpu.memory_space<vmem>>, %arg9: memref<384x128xf32, #tpu.memory_space<vmem>>, %arg10: memref<1x128xf32, #tpu.memory_space<vmem>>, %arg11: memref<384x128xf32, #tpu.memory_space<vmem>>, %arg12: memref<1x128xf32, #tpu.memory_space<vmem>>, %arg13: memref<16x128xf32, #tpu.memory_space<vmem>>, %arg14: memref<32x128xf32, #tpu.memory_space<vmem>>, %arg15: memref<2x128xf32, #tpu.memory_space<vmem>>) attributes {dimension_semantics = [], scalar_prefetch = 0 : i64, scratch_operands = 0 : i64, tpu.core_type = #tpu.core_type<tc>} {
    %c0 = arith.constant 0 : index
    %c0_0 = arith.constant 0 : index
    %0 = vector.load %arg0[%c0, %c0_0] : memref<16x128xf32, #tpu.memory_space<vmem>>, vector<16x128xf32>
    %c0_1 = arith.constant 0 : index
    %c0_2 = arith.constant 0 : index
    %1 = vector.load %arg1[%c0_1, %c0_2] : memref<32x128xf32, #tpu.memory_space<vmem>>, vector<32x128xf32>
    %c0_3 = arith.constant 0 : index
    %c0_4 = arith.constant 0 : index
    %2 = vector.load %arg2[%c0_3, %c0_4] : memref<2x128xf32, #tpu.memory_space<vmem>>, vector<2x128xf32>
    %c0_5 = arith.constant 0 : index
    %c0_6 = arith.constant 0 : index
    %3 = vector.load %arg3[%c0_5, %c0_6] : memref<32x1xi32, #tpu.memory_space<vmem>>, vector<32x1xi32>
    %c0_7 = arith.constant 0 : index
    %c0_8 = arith.constant 0 : index
    %4 = vector.load %arg4[%c0_7, %c0_8] : memref<32x1xi32, #tpu.memory_space<vmem>>, vector<32x1xi32>
    %c0_9 = arith.constant 0 : index
    %c0_10 = arith.constant 0 : index
    %5 = vector.load %arg5[%c0_9, %c0_10] : memref<16x1xi32, #tpu.memory_space<vmem>>, vector<16x1xi32>
    %c0_11 = arith.constant 0 : index
    %c0_12 = arith.constant 0 : index
    %6 = vector.load %arg6[%c0_11, %c0_12] : memref<32x1xi32, #tpu.memory_space<vmem>>, vector<32x1xi32>
    %7 = tpu.iota {dimensions = array<i32: 1>} : vector<32x16xi32>
    %8 = vector.broadcast %3 : vector<32x1xi32> to vector<32x16xi32>
    %9 = arith.cmpi eq, %8, %7 : vector<32x16xi32>
    %10 = arith.extui %9 : vector<32x16xi1> to vector<32x16xi32>
    %11 = arith.sitofp %10 : vector<32x16xi32> to vector<32x16xf32>
    %12 = vector.broadcast %4 : vector<32x1xi32> to vector<32x16xi32>
    %13 = arith.cmpi eq, %12, %7 : vector<32x16xi32>
    %14 = arith.extui %13 : vector<32x16xi1> to vector<32x16xi32>
    %15 = arith.sitofp %14 : vector<32x16xi32> to vector<32x16xf32>
    %16 = tpu.iota {dimensions = array<i32: 1>} : vector<16x2xi32>
    %17 = vector.broadcast %5 : vector<16x1xi32> to vector<16x2xi32>
    %18 = arith.cmpi eq, %17, %16 : vector<16x2xi32>
    %19 = arith.extui %18 : vector<16x2xi1> to vector<16x2xi32>
    %20 = arith.sitofp %19 : vector<16x2xi32> to vector<16x2xf32>
    %21 = tpu.iota {dimensions = array<i32: 1>} : vector<32x2xi32>
    %22 = vector.broadcast %6 : vector<32x1xi32> to vector<32x2xi32>
    %23 = arith.cmpi eq, %22, %21 : vector<32x2xi32>
    %24 = arith.extui %23 : vector<32x2xi1> to vector<32x2xi32>
    %25 = arith.sitofp %24 : vector<32x2xi32> to vector<32x2xf32>
    %26 = tpu.transpose %15, [1, 0] : vector<32x16xf32> -> vector<16x32xf32>
    %27 = tpu.transpose %20, [1, 0] : vector<16x2xf32> -> vector<2x16xf32>
    %c0_13 = arith.constant 0 : index
    %c0_14 = arith.constant 0 : index
    %28 = vector.load %arg7[%c0_13, %c0_14] : memref<512x128xf32, #tpu.memory_space<vmem>>, vector<512x128xf32>
    %c0_15 = arith.constant 0 : index
    %c0_16 = arith.constant 0 : index
    %29 = vector.load %arg8[%c0_15, %c0_16] : memref<1x128xf32, #tpu.memory_space<vmem>>, vector<1x128xf32>
    %c0_17 = arith.constant 0 : index
    %c0_18 = arith.constant 0 : index
    %30 = vector.load %arg9[%c0_17, %c0_18] : memref<384x128xf32, #tpu.memory_space<vmem>>, vector<384x128xf32>
    %c0_19 = arith.constant 0 : index
    %c0_20 = arith.constant 0 : index
    %31 = vector.load %arg10[%c0_19, %c0_20] : memref<1x128xf32, #tpu.memory_space<vmem>>, vector<1x128xf32>
    %c0_21 = arith.constant 0 : index
    %c0_22 = arith.constant 0 : index
    %32 = vector.load %arg11[%c0_21, %c0_22] : memref<384x128xf32, #tpu.memory_space<vmem>>, vector<384x128xf32>
    %c0_23 = arith.constant 0 : index
    %c0_24 = arith.constant 0 : index
    %33 = vector.load %arg12[%c0_23, %c0_24] : memref<1x128xf32, #tpu.memory_space<vmem>>, vector<1x128xf32>
    %c0_i32 = arith.constant 0 : i32
    %cst = arith.constant dense<0.000000e+00> : vector<32x128xf32>
    %34 = tpu.matmul %11, %0, %cst {dimension_numbers = #tpu.dot_dimension_numbers<[1], [0], [0], [1], [0, 0, 1, 1], [], []>} : vector<32x16xf32>, vector<16x128xf32>, vector<32x128xf32> -> vector<32x128xf32>
    %cst_25 = arith.constant dense<0.000000e+00> : vector<32x128xf32>
    %35 = tpu.matmul %15, %0, %cst_25 {dimension_numbers = #tpu.dot_dimension_numbers<[1], [0], [0], [1], [0, 0, 1, 1], [], []>} : vector<32x16xf32>, vector<16x128xf32>, vector<32x128xf32> -> vector<32x128xf32>
    %cst_26 = arith.constant dense<0.000000e+00> : vector<32x128xf32>
    %36 = tpu.matmul %25, %2, %cst_26 {dimension_numbers = #tpu.dot_dimension_numbers<[1], [0], [0], [1], [0, 0, 1, 1], [], []>} : vector<32x2xf32>, vector<2x128xf32>, vector<32x128xf32> -> vector<32x128xf32>
    %37 = tpu.concatenate %34, %35, %1, %36 in 1 : vector<32x128xf32>, vector<32x128xf32>, vector<32x128xf32>, vector<32x128xf32> -> vector<32x512xf32>
    %cst_27 = arith.constant dense<0.000000e+00> : vector<32x128xf32>
    %38 = tpu.matmul %37, %28, %cst_27 {dimension_numbers = #tpu.dot_dimension_numbers<[1], [0], [0], [1], [0, 0, 1, 1], [], []>} : vector<32x512xf32>, vector<512x128xf32>, vector<32x128xf32> -> vector<32x128xf32>
    %39 = vector.broadcast %29 : vector<1x128xf32> to vector<32x128xf32>
    %40 = arith.addf %38, %39 : vector<32x128xf32>
    %cst_28 = arith.constant 0.000000e+00 : f32
    %41 = vector.broadcast %cst_28 : f32 to vector<32x128xf32>
    %42 = arith.maximumf %40, %41 : vector<32x128xf32>
    %cst_29 = arith.constant dense<0.000000e+00> : vector<16x128xf32>
    %43 = tpu.matmul %26, %42, %cst_29 {dimension_numbers = #tpu.dot_dimension_numbers<[1], [0], [0], [1], [0, 0, 1, 1], [], []>} : vector<16x32xf32>, vector<32x128xf32>, vector<16x128xf32> -> vector<16x128xf32>
    %cst_30 = arith.constant dense<0.000000e+00> : vector<16x128xf32>
    %44 = tpu.matmul %20, %2, %cst_30 {dimension_numbers = #tpu.dot_dimension_numbers<[1], [0], [0], [1], [0, 0, 1, 1], [], []>} : vector<16x2xf32>, vector<2x128xf32>, vector<16x128xf32> -> vector<16x128xf32>
    %45 = tpu.concatenate %0, %43, %44 in 1 : vector<16x128xf32>, vector<16x128xf32>, vector<16x128xf32> -> vector<16x384xf32>
    %cst_31 = arith.constant dense<0.000000e+00> : vector<16x128xf32>
    %46 = tpu.matmul %45, %30, %cst_31 {dimension_numbers = #tpu.dot_dimension_numbers<[1], [0], [0], [1], [0, 0, 1, 1], [], []>} : vector<16x384xf32>, vector<384x128xf32>, vector<16x128xf32> -> vector<16x128xf32>
    %47 = vector.broadcast %31 : vector<1x128xf32> to vector<16x128xf32>
    %48 = arith.addf %46, %47 : vector<16x128xf32>
    %cst_32 = arith.constant 0.000000e+00 : f32
    %49 = vector.broadcast %cst_32 : f32 to vector<16x128xf32>
    %50 = arith.maximumf %48, %49 : vector<16x128xf32>
    %cst_33 = arith.constant dense<0.000000e+00> : vector<2x128xf32>
    %51 = tpu.matmul %27, %50, %cst_33 {dimension_numbers = #tpu.dot_dimension_numbers<[1], [0], [0], [1], [0, 0, 1, 1], [], []>} : vector<2x16xf32>, vector<16x128xf32>, vector<2x128xf32> -> vector<2x128xf32>
    %cst_34 = arith.constant dense<0.000000e+00> : vector<2x128xf32>
    %52 = tpu.matmul %27, %43, %cst_34 {dimension_numbers = #tpu.dot_dimension_numbers<[1], [0], [0], [1], [0, 0, 1, 1], [], []>} : vector<2x16xf32>, vector<16x128xf32>, vector<2x128xf32> -> vector<2x128xf32>
    %53 = tpu.concatenate %51, %52, %2 in 1 : vector<2x128xf32>, vector<2x128xf32>, vector<2x128xf32> -> vector<2x384xf32>
    %cst_35 = arith.constant dense<0.000000e+00> : vector<2x128xf32>
    %54 = tpu.matmul %53, %32, %cst_35 {dimension_numbers = #tpu.dot_dimension_numbers<[1], [0], [0], [1], [0, 0, 1, 1], [], []>} : vector<2x384xf32>, vector<384x128xf32>, vector<2x128xf32> -> vector<2x128xf32>
    %55 = vector.broadcast %33 : vector<1x128xf32> to vector<2x128xf32>
    %56 = arith.addf %54, %55 : vector<2x128xf32>
    %cst_36 = arith.constant 0.000000e+00 : f32
    %57 = vector.broadcast %cst_36 : f32 to vector<2x128xf32>
    %58 = arith.maximumf %56, %57 : vector<2x128xf32>
    %c1_i32 = arith.constant 1 : i32
    %cst_37 = arith.constant dense<0.000000e+00> : vector<32x128xf32>
    %59 = tpu.matmul %11, %50, %cst_37 {dimension_numbers = #tpu.dot_dimension_numbers<[1], [0], [0], [1], [0, 0, 1, 1], [], []>} : vector<32x16xf32>, vector<16x128xf32>, vector<32x128xf32> -> vector<32x128xf32>
    %cst_38 = arith.constant dense<0.000000e+00> : vector<32x128xf32>
    %60 = tpu.matmul %15, %50, %cst_38 {dimension_numbers = #tpu.dot_dimension_numbers<[1], [0], [0], [1], [0, 0, 1, 1], [], []>} : vector<32x16xf32>, vector<16x128xf32>, vector<32x128xf32> -> vector<32x128xf32>
    %cst_39 = arith.constant dense<0.000000e+00> : vector<32x128xf32>
    %61 = tpu.matmul %25, %58, %cst_39 {dimension_numbers = #tpu.dot_dimension_numbers<[1], [0], [0], [1], [0, 0, 1, 1], [], []>} : vector<32x2xf32>, vector<2x128xf32>, vector<32x128xf32> -> vector<32x128xf32>
    %62 = tpu.concatenate %59, %60, %42, %61 in 1 : vector<32x128xf32>, vector<32x128xf32>, vector<32x128xf32>, vector<32x128xf32> -> vector<32x512xf32>
    %cst_40 = arith.constant dense<0.000000e+00> : vector<32x128xf32>
    %63 = tpu.matmul %62, %28, %cst_40 {dimension_numbers = #tpu.dot_dimension_numbers<[1], [0], [0], [1], [0, 0, 1, 1], [], []>} : vector<32x512xf32>, vector<512x128xf32>, vector<32x128xf32> -> vector<32x128xf32>
    %64 = vector.broadcast %29 : vector<1x128xf32> to vector<32x128xf32>
    %65 = arith.addf %63, %64 : vector<32x128xf32>
    %cst_41 = arith.constant 0.000000e+00 : f32
    %66 = vector.broadcast %cst_41 : f32 to vector<32x128xf32>
    %67 = arith.maximumf %65, %66 : vector<32x128xf32>
    %cst_42 = arith.constant dense<0.000000e+00> : vector<16x128xf32>
    %68 = tpu.matmul %26, %67, %cst_42 {dimension_numbers = #tpu.dot_dimension_numbers<[1], [0], [0], [1], [0, 0, 1, 1], [], []>} : vector<16x32xf32>, vector<32x128xf32>, vector<16x128xf32> -> vector<16x128xf32>
    %cst_43 = arith.constant dense<0.000000e+00> : vector<16x128xf32>
    %69 = tpu.matmul %20, %58, %cst_43 {dimension_numbers = #tpu.dot_dimension_numbers<[1], [0], [0], [1], [0, 0, 1, 1], [], []>} : vector<16x2xf32>, vector<2x128xf32>, vector<16x128xf32> -> vector<16x128xf32>
    %70 = tpu.concatenate %50, %68, %69 in 1 : vector<16x128xf32>, vector<16x128xf32>, vector<16x128xf32> -> vector<16x384xf32>
    %cst_44 = arith.constant dense<0.000000e+00> : vector<16x128xf32>
    %71 = tpu.matmul %70, %30, %cst_44 {dimension_numbers = #tpu.dot_dimension_numbers<[1], [0], [0], [1], [0, 0, 1, 1], [], []>} : vector<16x384xf32>, vector<384x128xf32>, vector<16x128xf32> -> vector<16x128xf32>
    %72 = vector.broadcast %31 : vector<1x128xf32> to vector<16x128xf32>
    %73 = arith.addf %71, %72 : vector<16x128xf32>
    %cst_45 = arith.constant 0.000000e+00 : f32
    %74 = vector.broadcast %cst_45 : f32 to vector<16x128xf32>
    %75 = arith.maximumf %73, %74 : vector<16x128xf32>
    %cst_46 = arith.constant dense<0.000000e+00> : vector<2x128xf32>
    %76 = tpu.matmul %27, %75, %cst_46 {dimension_numbers = #tpu.dot_dimension_numbers<[1], [0], [0], [1], [0, 0, 1, 1], [], []>} : vector<2x16xf32>, vector<16x128xf32>, vector<2x128xf32> -> vector<2x128xf32>
    %cst_47 = arith.constant dense<0.000000e+00> : vector<2x128xf32>
    %77 = tpu.matmul %27, %68, %cst_47 {dimension_numbers = #tpu.dot_dimension_numbers<[1], [0], [0], [1], [0, 0, 1, 1], [], []>} : vector<2x16xf32>, vector<16x128xf32>, vector<2x128xf32> -> vector<2x128xf32>
    %78 = tpu.concatenate %76, %77, %58 in 1 : vector<2x128xf32>, vector<2x128xf32>, vector<2x128xf32> -> vector<2x384xf32>
    %cst_48 = arith.constant dense<0.000000e+00> : vector<2x128xf32>
    %79 = tpu.matmul %78, %32, %cst_48 {dimension_numbers = #tpu.dot_dimension_numbers<[1], [0], [0], [1], [0, 0, 1, 1], [], []>} : vector<2x384xf32>, vector<384x128xf32>, vector<2x128xf32> -> vector<2x128xf32>
    %80 = vector.broadcast %33 : vector<1x128xf32> to vector<2x128xf32>
    %81 = arith.addf %79, %80 : vector<2x128xf32>
    %cst_49 = arith.constant 0.000000e+00 : f32
    %82 = vector.broadcast %cst_49 : f32 to vector<2x128xf32>
    %83 = arith.maximumf %81, %82 : vector<2x128xf32>
    %c0_50 = arith.constant 0 : index
    %c0_51 = arith.constant 0 : index
    %84 = vector.load %arg13[%c0_50, %c0_51] : memref<16x128xf32, #tpu.memory_space<vmem>>, vector<16x128xf32>
    tpu.vector_store %arg13[%c0_50, %c0_51], %75 {strides = array<i32>} : memref<16x128xf32, #tpu.memory_space<vmem>>, vector<16x128xf32>,
    %c0_52 = arith.constant 0 : index
    %c0_53 = arith.constant 0 : index
    %85 = vector.load %arg14[%c0_52, %c0_53] : memref<32x128xf32, #tpu.memory_space<vmem>>, vector<32x128xf32>
    tpu.vector_store %arg14[%c0_52, %c0_53], %67 {strides = array<i32>} : memref<32x128xf32, #tpu.memory_space<vmem>>, vector<32x128xf32>,
    %c0_54 = arith.constant 0 : index
    %c0_55 = arith.constant 0 : index
    %86 = vector.load %arg15[%c0_54, %c0_55] : memref<2x128xf32, #tpu.memory_space<vmem>>, vector<2x128xf32>
    tpu.vector_store %arg15[%c0_54, %c0_55], %83 {strides = array<i32>} : memref<2x128xf32, #tpu.memory_space<vmem>>, vector<2x128xf32>,
    return
  }
}

</mosaic_0001>

<llo_original>
// kernel: _gn_forward.1
$region0: #{_gn_forward.1}
  #allocation0 [shape = 'u32[]', space=smem, size = 0x4, offset = 0x4, fixed_abs, tag = 'smem constant byte address 0x4 - core index']
  #allocation1 [shape = 'u32[144,128]{1,0:T(1,128)}', space=vmem, size = 0x12000, scoped, tag = 'internal scratch']
  %s0 = inlined_call_operand.vmem [shape: f32[16,128], index: 0, kind: input, shape index: {}]
  %s1 = inlined_call_operand.vmem [shape: f32[32,128], index: 1, kind: input, shape index: {}]
  %s2 = inlined_call_operand.vmem [shape: f32[2,128], index: 2, kind: input, shape index: {}]
  %s3 = inlined_call_operand.vmem [shape: s32[32,1], index: 3, kind: input, shape index: {}]
  %s4 = inlined_call_operand.vmem [shape: s32[32,1], index: 4, kind: input, shape index: {}]
  %s5 = inlined_call_operand.vmem [shape: s32[16,1], index: 5, kind: input, shape index: {}]
  %s6 = inlined_call_operand.vmem [shape: s32[32,1], index: 6, kind: input, shape index: {}]
  %s7 = inlined_call_operand.vmem [shape: f32[512,128], index: 7, kind: input, shape index: {}]
  %s8 = inlined_call_operand.vmem [shape: f32[1,128], index: 8, kind: input, shape index: {}]
  %s9 = inlined_call_operand.vmem [shape: f32[384,128], index: 9, kind: input, shape index: {}]
  %s10 = inlined_call_operand.vmem [shape: f32[1,128], index: 10, kind: input, shape index: {}]
  %s11 = inlined_call_operand.vmem [shape: f32[384,128], index: 11, kind: input, shape index: {}]
  %s12 = inlined_call_operand.vmem [shape: f32[1,128], index: 12, kind: input, shape index: {}]
  %s13 = inlined_call_operand.vmem [shape: f32[16,128], index: 13, kind: output, shape index: {0}]
  %s14 = inlined_call_operand.vmem [shape: f32[32,128], index: 14, kind: output, shape index: {1}]
  %s15 = inlined_call_operand.hbm [shape: f32[2,128], index: 15, kind: output, shape index: {2}]
  %16 = xla_tuple %s13, %s14, %s15
  %s17 = sld [smem:[#allocation0]]
  $region78: #{_gn_forward.1} parent=0
    _
  %s19 = ssub.s32 1, %s17
  %s20 = scalar_select 0, %s19, %s17
  $region1: #{_gn_forward.1} parent=0
    #allocation2 [shape = 'u8[1024]{0}', space=vmem, size = 0x400, scoped, tag = 'output window, operand 2, single buffered']
    #allocation3 [shape = 's32[1]{0}', space=sflag, size = 0x4, scoped, tag = 'scoped memory for _gn_forward.1']
    %21 = vsyncpa [#allocation3], 0
    // Predicated region
    $region2: #{_gn_forward.1} parent=1 // pred_check
      _
    $region3: #{_gn_forward.1} parent=1 // pred_check_branch
      %23 = sbr.rel (0) target = $region5
    $region4: #{_gn_forward.1} parent=1 // pred_region
      _
    $region5: #{_gn_forward.1} parent=1 // pred_fallthru
      _
    // Predicated region
    $region6: #{_gn_forward.1} parent=1 // pred_check
      _
    $region7: #{_gn_forward.1} parent=1 // pred_check_branch
      %25 = sbr.rel (0) target = $region9
    $region8: #{_gn_forward.1} parent=1 // pred_region
      _
    $region9: #{_gn_forward.1} parent=1 // pred_fallthru
      _
    // Predicated region
    $region10: #{_gn_forward.1} parent=1 // pred_check
      _
    $region11: #{_gn_forward.1} parent=1 // pred_check_branch
      %27 = sbr.rel (0) target = $region13
    $region12: #{_gn_forward.1} parent=1 // pred_region
      _
    $region13: #{_gn_forward.1} parent=1 // pred_fallthru
      _
    // Predicated region
    $region14: #{_gn_forward.1} parent=1 // pred_check
      _
    $region15: #{_gn_forward.1} parent=1 // pred_check_branch
      %29 = sbr.rel (0) target = $region17
    $region16: #{_gn_forward.1} parent=1 // pred_region
      _
    $region17: #{_gn_forward.1} parent=1 // pred_fallthru
      _
    // Predicated region
    $region18: #{_gn_forward.1} parent=1 // pred_check
      _
    $region19: #{_gn_forward.1} parent=1 // pred_check_branch
      %31 = sbr.rel (0) target = $region21
    $region20: #{_gn_forward.1} parent=1 // pred_region
      _
    $region21: #{_gn_forward.1} parent=1 // pred_fallthru
      _
    // Predicated region
    $region22: #{_gn_forward.1} parent=1 // pred_check
      _
    $region23: #{_gn_forward.1} parent=1 // pred_check_branch
      %33 = sbr.rel (0) target = $region25
    $region24: #{_gn_forward.1} parent=1 // pred_region
      _
    $region25: #{_gn_forward.1} parent=1 // pred_fallthru
      _
    // Predicated region
    $region26: #{_gn_forward.1} parent=1 // pred_check
      _
    $region27: #{_gn_forward.1} parent=1 // pred_check_branch
      %35 = sbr.rel (0) target = $region29
    $region28: #{_gn_forward.1} parent=1 // pred_region
      _
    $region29: #{_gn_forward.1} parent=1 // pred_fallthru
      _
    // Predicated region
    $region30: #{_gn_forward.1} parent=1 // pred_check
      _
    $region31: #{_gn_forward.1} parent=1 // pred_check_branch
      %37 = sbr.rel (0) target = $region33
    $region32: #{_gn_forward.1} parent=1 // pred_region
      _
    $region33: #{_gn_forward.1} parent=1 // pred_fallthru
      _
    // Predicated region
    $region34: #{_gn_forward.1} parent=1 // pred_check
      _
    $region35: #{_gn_forward.1} parent=1 // pred_check_branch
      %39 = sbr.rel (0) target = $region37
    $region36: #{_gn_forward.1} parent=1 // pred_region
      _
    $region37: #{_gn_forward.1} parent=1 // pred_fallthru
      _
    // Predicated region
    $region38: #{_gn_forward.1} parent=1 // pred_check
      _
    $region39: #{_gn_forward.1} parent=1 // pred_check_branch
      %41 = sbr.rel (0) target = $region41
    $region40: #{_gn_forward.1} parent=1 // pred_region
      _
    $region41: #{_gn_forward.1} parent=1 // pred_fallthru
      _
    // Predicated region
    $region42: #{_gn_forward.1} parent=1 // pred_check
      _
    $region43: #{_gn_forward.1} parent=1 // pred_check_branch
      %43 = sbr.rel (0) target = $region45
    $region44: #{_gn_forward.1} parent=1 // pred_region
      _
    $region45: #{_gn_forward.1} parent=1 // pred_fallthru
      _
    // Predicated region
    $region46: #{_gn_forward.1} parent=1 // pred_check
      _
    $region47: #{_gn_forward.1} parent=1 // pred_check_branch
      %45 = sbr.rel (0) target = $region49
    $region48: #{_gn_forward.1} parent=1 // pred_region
      _
    $region49: #{_gn_forward.1} parent=1 // pred_fallthru
      _
    // Predicated region
    $region50: #{_gn_forward.1} parent=1 // pred_check
      _
    $region51: #{_gn_forward.1} parent=1 // pred_check_branch
      %47 = sbr.rel (0) target = $region53
    $region52: #{_gn_forward.1} parent=1 // pred_region
      _
    $region53: #{_gn_forward.1} parent=1 // pred_fallthru
      _
    %v48 = vld [vmem:[%s0] sm:$0xff]
    %v49 = vld [vmem:[%s0 + $0x8] sm:$0xff]
    %v50 = vld [vmem:[%s1] sm:$0xff]
    %v51 = vld [vmem:[%s1 + $0x8] sm:$0xff]
    %v52 = vld [vmem:[%s1 + $0x10] sm:$0xff]
    %v53 = vld [vmem:[%s1 + $0x18] sm:$0xff]
    %v54 = vld [vmem:[%s2] sm:$0x3]
    %v55 = vld [vmem:[%s3] sm:$0xff]
    %v56 = vld [vmem:[%s3 + $0x8] sm:$0xff]
    %v57 = vld [vmem:[%s3 + $0x10] sm:$0xff]
    %v58 = vld [vmem:[%s3 + $0x18] sm:$0xff]
    %v59 = vld [vmem:[%s4] sm:$0xff]
    %v60 = vld [vmem:[%s4 + $0x8] sm:$0xff]
    %v61 = vld [vmem:[%s4 + $0x10] sm:$0xff]
    %v62 = vld [vmem:[%s4 + $0x18] sm:$0xff]
    %v63 = vld [vmem:[%s5] sm:$0xff]
    %v64 = vld [vmem:[%s5 + $0x8] sm:$0xff]
    %v65 = vld [vmem:[%s6] sm:$0xff]
    %v66 = vld [vmem:[%s6 + $0x8] sm:$0xff]
    %v67 = vld [vmem:[%s6 + $0x10] sm:$0xff]
    %v68 = vld [vmem:[%s6 + $0x18] sm:$0xff]
    %v69 = vlaneseq
    %v70 = vand.u32 %v69, 127
    %71 = vset.pattern.permute.xlu0 0
    %72 = vperm.xlu0 %71, %v55
    %v73 = vpop.permute.xlu0 %72
    %74 = vset.pattern.permute.xlu0 0
    %75 = vperm.xlu0 %74, %v56
    %v76 = vpop.permute.xlu0 %75
    %77 = vset.pattern.permute.xlu0 0
    %78 = vperm.xlu0 %77, %v57
    %v79 = vpop.permute.xlu0 %78
    %80 = vset.pattern.permute.xlu0 0
    %81 = vperm.xlu0 %80, %v58
    %v82 = vpop.permute.xlu0 %81
    %vm83 = vcmp.eq.s32.totalorder %v73, %v70
    %vm84 = vcmp.eq.s32.totalorder %v76, %v70
    %vm85 = vcmp.eq.s32.totalorder %v79, %v70
    %vm86 = vcmp.eq.s32.totalorder %v82, %v70
    %v87 = vsel %vm83, 1, 0
    %v88 = vsel %vm84, 1, 0
    %v89 = vsel %vm85, 1, 0
    %v90 = vsel %vm86, 1, 0
    %v91 = vcvt.s32.f32 %v87
    %v92 = vcvt.s32.f32 %v88
    %v93 = vcvt.s32.f32 %v89
    %v94 = vcvt.s32.f32 %v90
    %95 = vset.pattern.permute.xlu0 0
    %96 = vperm.xlu0 %95, %v59
    %v97 = vpop.permute.xlu0 %96
    %98 = vset.pattern.permute.xlu0 0
    %99 = vperm.xlu0 %98, %v60
    %v100 = vpop.permute.xlu0 %99
    %101 = vset.pattern.permute.xlu0 0
    %102 = vperm.xlu0 %101, %v61
    %v103 = vpop.permute.xlu0 %102
    %104 = vset.pattern.permute.xlu0 0
    %105 = vperm.xlu0 %104, %v62
    %v106 = vpop.permute.xlu0 %105
    %vm107 = vcmp.eq.s32.totalorder %v97, %v70
    %vm108 = vcmp.eq.s32.totalorder %v100, %v70
    %vm109 = vcmp.eq.s32.totalorder %v103, %v70
    %vm110 = vcmp.eq.s32.totalorder %v106, %v70
    %v111 = vsel %vm107, 1, 0
    %v112 = vsel %vm108, 1, 0
    %v113 = vsel %vm109, 1, 0
    %v114 = vsel %vm110, 1, 0
    %v115 = vcvt.s32.f32 %v111
    %v116 = vcvt.s32.f32 %v112
    %v117 = vcvt.s32.f32 %v113
    %v118 = vcvt.s32.f32 %v114
    %119 = vset.pattern.permute.xlu0 0
    %120 = vperm.xlu0 %119, %v63
    %v121 = vpop.permute.xlu0 %120
    %122 = vset.pattern.permute.xlu0 0
    %123 = vperm.xlu0 %122, %v64
    %v124 = vpop.permute.xlu0 %123
    %vm125 = vcmp.eq.s32.totalorder %v121, %v70
    %vm126 = vcmp.eq.s32.totalorder %v124, %v70
    %v127 = vsel %vm125, 1, 0
    %v128 = vsel %vm126, 1, 0
    %v129 = vcvt.s32.f32 %v127
    %v130 = vcvt.s32.f32 %v128
    %131 = vset.pattern.permute.xlu0 0
    %132 = vperm.xlu0 %131, %v65
    %v133 = vpop.permute.xlu0 %132
    %134 = vset.pattern.permute.xlu0 0
    %135 = vperm.xlu0 %134, %v66
    %v136 = vpop.permute.xlu0 %135
    %137 = vset.pattern.permute.xlu0 0
    %138 = vperm.xlu0 %137, %v67
    %v139 = vpop.permute.xlu0 %138
    %140 = vset.pattern.permute.xlu0 0
    %141 = vperm.xlu0 %140, %v68
    %v142 = vpop.permute.xlu0 %141
    %vm143 = vcmp.eq.s32.totalorder %v133, %v70
    %vm144 = vcmp.eq.s32.totalorder %v136, %v70
    %vm145 = vcmp.eq.s32.totalorder %v139, %v70
    %vm146 = vcmp.eq.s32.totalorder %v142, %v70
    %v147 = vsel %vm143, 1, 0
    %v148 = vsel %vm144, 1, 0
    %v149 = vsel %vm145, 1, 0
    %v150 = vsel %vm146, 1, 0
    %v151 = vcvt.s32.f32 %v147
    %v152 = vcvt.s32.f32 %v148
    %v153 = vcvt.s32.f32 %v149
    %v154 = vcvt.s32.f32 %v150
    %155 = vxpose.xlu0.b32.start [1/16] %v115, 128
    %156 = vxpose.xlu0.b32.cont [2/16] %v116, 128
    %157 = vxpose.xlu0.b32.cont [3/16] %v117, 128
    %158 = vxpose.xlu0.b32.cont [4/16] %v118, 128
    %159 = vxpose.xlu0.b32.cont [5/16] 0.0, 128
    %160 = vxpose.xlu0.b32.cont [6/16] 0.0, 128
    %161 = vxpose.xlu0.b32.cont [7/16] 0.0, 128
    %162 = vxpose.xlu0.b32.cont [8/16] 0.0, 128
    %163 = vxpose.xlu0.b32.cont [9/16] 0.0, 128
    %164 = vxpose.xlu0.b32.cont [10/16] 0.0, 128
    %165 = vxpose.xlu0.b32.cont [11/16] 0.0, 128
    %166 = vxpose.xlu0.b32.cont [12/16] 0.0, 128
    %167 = vxpose.xlu0.b32.cont [13/16] 0.0, 128
    %168 = vxpose.xlu0.b32.cont [14/16] 0.0, 128
    %169 = vxpose.xlu0.b32.cont [15/16] 0.0, 128
    %170 = vxpose.xlu0.b32.end [16/16] 0.0, 128
    %v171 = vpop.trf.xlu0
    %v172 = vpop.trf.xlu0
    %v173 = vpop.trf.xlu0
    %v174 = vpop.trf.xlu0
    %v175 = vpop.trf.xlu0
    %v176 = vpop.trf.xlu0
    %v177 = vpop.trf.xlu0
    %v178 = vpop.trf.xlu0
    %v179 = vpop.trf.xlu0
    %v180 = vpop.trf.xlu0
    %v181 = vpop.trf.xlu0
    %v182 = vpop.trf.xlu0
    %v183 = vpop.trf.xlu0
    %v184 = vpop.trf.xlu0
    %v185 = vpop.trf.xlu0
    %v186 = vpop.trf.xlu0
    %187 = vxpose.xlu0.b32.start [1/16] %v129, 128
    %188 = vxpose.xlu0.b32.cont [2/16] %v130, 128
    %189 = vxpose.xlu0.b32.cont [3/16] 0.0, 128
    %190 = vxpose.xlu0.b32.cont [4/16] 0.0, 128
    %191 = vxpose.xlu0.b32.cont [5/16] 0.0, 128
    %192 = vxpose.xlu0.b32.cont [6/16] 0.0, 128
    %193 = vxpose.xlu0.b32.cont [7/16] 0.0, 128
    %194 = vxpose.xlu0.b32.cont [8/16] 0.0, 128
    %195 = vxpose.xlu0.b32.cont [9/16] 0.0, 128
    %196 = vxpose.xlu0.b32.cont [10/16] 0.0, 128
    %197 = vxpose.xlu0.b32.cont [11/16] 0.0, 128
    %198 = vxpose.xlu0.b32.cont [12/16] 0.0, 128
    %199 = vxpose.xlu0.b32.cont [13/16] 0.0, 128
    %200 = vxpose.xlu0.b32.cont [14/16] 0.0, 128
    %201 = vxpose.xlu0.b32.cont [15/16] 0.0, 128
    %202 = vxpose.xlu0.b32.end [16/16] 0.0, 128
    %v203 = vpop.trf.xlu0
    %v204 = vpop.trf.xlu0
    %v205 = vpop.trf.xlu0
    %v206 = vpop.trf.xlu0
    %v207 = vpop.trf.xlu0
    %v208 = vpop.trf.xlu0
    %v209 = vpop.trf.xlu0
    %v210 = vpop.trf.xlu0
    %v211 = vpop.trf.xlu0
    %v212 = vpop.trf.xlu0
    %v213 = vpop.trf.xlu0
    %v214 = vpop.trf.xlu0
    %v215 = vpop.trf.xlu0
    %v216 = vpop.trf.xlu0
    %v217 = vpop.trf.xlu0
    %v218 = vpop.trf.xlu0
    %v219 = vld [vmem:[%s7] sm:$0xff]
    %v220 = vld [vmem:[%s7 + $0x8] sm:$0xff]
    %v221 = vld [vmem:[%s7 + $0x10] sm:$0xff]
    %v222 = vld [vmem:[%s7 + $0x18] sm:$0xff]
    %v223 = vld [vmem:[%s7 + $0x20] sm:$0xff]
    %v224 = vld [vmem:[%s7 + $0x28] sm:$0xff]
    %v225 = vld [vmem:[%s7 + $0x30] sm:$0xff]
    %v226 = vld [vmem:[%s7 + $0x38] sm:$0xff]
    %v227 = vld [vmem:[%s7 + $0x40] sm:$0xff]
    %v228 = vld [vmem:[%s7 + $0x48] sm:$0xff]
    %v229 = vld [vmem:[%s7 + $0x50] sm:$0xff]
    %v230 = vld [vmem:[%s7 + $0x58] sm:$0xff]
    %v231 = vld [vmem:[%s7 + $0x60] sm:$0xff]
    %v232 = vld [vmem:[%s7 + $0x68] sm:$0xff]
    %v233 = vld [vmem:[%s7 + $0x70] sm:$0xff]
    %v234 = vld [vmem:[%s7 + $0x78] sm:$0xff]
    %v235 = vld [vmem:[%s7 + $0x80] sm:$0xff]
    %v236 = vld [vmem:[%s7 + $0x88] sm:$0xff]
    %v237 = vld [vmem:[%s7 + $0x90] sm:$0xff]
    %v238 = vld [vmem:[%s7 + $0x98] sm:$0xff]
    %v239 = vld [vmem:[%s7 + $0xa0] sm:$0xff]
    %v240 = vld [vmem:[%s7 + $0xa8] sm:$0xff]
    %v241 = vld [vmem:[%s7 + $0xb0] sm:$0xff]
    %v242 = vld [vmem:[%s7 + $0xb8] sm:$0xff]
    %v243 = vld [vmem:[%s7 + $0xc0] sm:$0xff]
    %v244 = vld [vmem:[%s7 + $0xc8] sm:$0xff]
    %v245 = vld [vmem:[%s7 + $0xd0] sm:$0xff]
    %v246 = vld [vmem:[%s7 + $0xd8] sm:$0xff]
    %v247 = vld [vmem:[%s7 + $0xe0] sm:$0xff]
    %v248 = vld [vmem:[%s7 + $0xe8] sm:$0xff]
    %v249 = vld [vmem:[%s7 + $0xf0] sm:$0xff]
    %v250 = vld [vmem:[%s7 + $0xf8] sm:$0xff]
    %v251 = vld [vmem:[%s7 + $0x100] sm:$0xff]
    %v252 = vld [vmem:[%s7 + $0x108] sm:$0xff]
    %v253 = vld [vmem:[%s7 + $0x110] sm:$0xff]
    %v254 = vld [vmem:[%s7 + $0x118] sm:$0xff]
    %v255 = vld [vmem:[%s7 + $0x120] sm:$0xff]
    %v256 = vld [vmem:[%s7 + $0x128] sm:$0xff]
    %v257 = vld [vmem:[%s7 + $0x130] sm:$0xff]
    %v258 = vld [vmem:[%s7 + $0x138] sm:$0xff]
    %v259 = vld [vmem:[%s7 + $0x140] sm:$0xff]
    %v260 = vld [vmem:[%s7 + $0x148] sm:$0xff]
    %v261 = vld [vmem:[%s7 + $0x150] sm:$0xff]
    %v262 = vld [vmem:[%s7 + $0x158] sm:$0xff]
    %v263 = vld [vmem:[%s7 + $0x160] sm:$0xff]
    %v264 = vld [vmem:[%s7 + $0x168] sm:$0xff]
    %v265 = vld [vmem:[%s7 + $0x170] sm:$0xff]
    %v266 = vld [vmem:[%s7 + $0x178] sm:$0xff]
    %v267 = vld [vmem:[%s7 + $0x180] sm:$0xff]
    %v268 = vld [vmem:[%s7 + $0x188] sm:$0xff]
    %v269 = vld [vmem:[%s7 + $0x190] sm:$0xff]
    %v270 = vld [vmem:[%s7 + $0x198] sm:$0xff]
    %v271 = vld [vmem:[%s7 + $0x1a0] sm:$0xff]
    %v272 = vld [vmem:[%s7 + $0x1a8] sm:$0xff]
    %v273 = vld [vmem:[%s7 + $0x1b0] sm:$0xff]
    %v274 = vld [vmem:[%s7 + $0x1b8] sm:$0xff]
    %v275 = vld [vmem:[%s7 + $0x1c0] sm:$0xff]
    %v276 = vld [vmem:[%s7 + $0x1c8] sm:$0xff]
    %v277 = vld [vmem:[%s7 + $0x1d0] sm:$0xff]
    %v278 = vld [vmem:[%s7 + $0x1d8] sm:$0xff]
    %v279 = vld [vmem:[%s7 + $0x1e0] sm:$0xff]
    %v280 = vld [vmem:[%s7 + $0x1e8] sm:$0xff]
    %v281 = vld [vmem:[%s7 + $0x1f0] sm:$0xff]
    %v282 = vld [vmem:[%s7 + $0x1f8] sm:$0xff]
    %v283 = vld [vmem:[%s8] sm:$0x1]
    %v284 = vld [vmem:[%s9] sm:$0xff]
    %v285 = vld [vmem:[%s9 + $0x8] sm:$0xff]
    %v286 = vld [vmem:[%s9 + $0x10] sm:$0xff]
    %v287 = vld [vmem:[%s9 + $0x18] sm:$0xff]
    %v288 = vld [vmem:[%s9 + $0x20] sm:$0xff]
    %v289 = vld [vmem:[%s9 + $0x28] sm:$0xff]
    %v290 = vld [vmem:[%s9 + $0x30] sm:$0xff]
    %v291 = vld [vmem:[%s9 + $0x38] sm:$0xff]
    %v292 = vld [vmem:[%s9 + $0x40] sm:$0xff]
    %v293 = vld [vmem:[%s9 + $0x48] sm:$0xff]
    %v294 = vld [vmem:[%s9 + $0x50] sm:$0xff]
    %v295 = vld [vmem:[%s9 + $0x58] sm:$0xff]
    %v296 = vld [vmem:[%s9 + $0x60] sm:$0xff]
    %v297 = vld [vmem:[%s9 + $0x68] sm:$0xff]
    %v298 = vld [vmem:[%s9 + $0x70] sm:$0xff]
    %v299 = vld [vmem:[%s9 + $0x78] sm:$0xff]
    %v300 = vld [vmem:[%s9 + $0x80] sm:$0xff]
    %v301 = vld [vmem:[%s9 + $0x88] sm:$0xff]
    %v302 = vld [vmem:[%s9 + $0x90] sm:$0xff]
    %v303 = vld [vmem:[%s9 + $0x98] sm:$0xff]
    %v304 = vld [vmem:[%s9 + $0xa0] sm:$0xff]
    %v305 = vld [vmem:[%s9 + $0xa8] sm:$0xff]
    %v306 = vld [vmem:[%s9 + $0xb0] sm:$0xff]
    %v307 = vld [vmem:[%s9 + $0xb8] sm:$0xff]
    %v308 = vld [vmem:[%s9 + $0xc0] sm:$0xff]
    %v309 = vld [vmem:[%s9 + $0xc8] sm:$0xff]
    %v310 = vld [vmem:[%s9 + $0xd0] sm:$0xff]
    %v311 = vld [vmem:[%s9 + $0xd8] sm:$0xff]
    %v312 = vld [vmem:[%s9 + $0xe0] sm:$0xff]
    %v313 = vld [vmem:[%s9 + $0xe8] sm:$0xff]
    %v314 = vld [vmem:[%s9 + $0xf0] sm:$0xff]
    %v315 = vld [vmem:[%s9 + $0xf8] sm:$0xff]
    %v316 = vld [vmem:[%s9 + $0x100] sm:$0xff]
    %v317 = vld [vmem:[%s9 + $0x108] sm:$0xff]
    %v318 = vld [vmem:[%s9 + $0x110] sm:$0xff]
    %v319 = vld [vmem:[%s9 + $0x118] sm:$0xff]
    %v320 = vld [vmem:[%s9 + $0x120] sm:$0xff]
    %v321 = vld [vmem:[%s9 + $0x128] sm:$0xff]
    %v322 = vld [vmem:[%s9 + $0x130] sm:$0xff]
    %v323 = vld [vmem:[%s9 + $0x138] sm:$0xff]
    %v324 = vld [vmem:[%s9 + $0x140] sm:$0xff]
    %v325 = vld [vmem:[%s9 + $0x148] sm:$0xff]
    %v326 = vld [vmem:[%s9 + $0x150] sm:$0xff]
    %v327 = vld [vmem:[%s9 + $0x158] sm:$0xff]
    %v328 = vld [vmem:[%s9 + $0x160] sm:$0xff]
    %v329 = vld [vmem:[%s9 + $0x168] sm:$0xff]
    %v330 = vld [vmem:[%s9 + $0x170] sm:$0xff]
    %v331 = vld [vmem:[%s9 + $0x178] sm:$0xff]
    %v332 = vld [vmem:[%s10] sm:$0x1]
    %v333 = vld [vmem:[%s11] sm:$0xff]
    %v334 = vld [vmem:[%s11 + $0x8] sm:$0xff]
    %v335 = vld [vmem:[%s11 + $0x10] sm:$0xff]
    %v336 = vld [vmem:[%s11 + $0x18] sm:$0xff]
    %v337 = vld [vmem:[%s11 + $0x20] sm:$0xff]
    %v338 = vld [vmem:[%s11 + $0x28] sm:$0xff]
    %v339 = vld [vmem:[%s11 + $0x30] sm:$0xff]
    %v340 = vld [vmem:[%s11 + $0x38] sm:$0xff]
    %v341 = vld [vmem:[%s11 + $0x40] sm:$0xff]
    %v342 = vld [vmem:[%s11 + $0x48] sm:$0xff]
    %v343 = vld [vmem:[%s11 + $0x50] sm:$0xff]
    %v344 = vld [vmem:[%s11 + $0x58] sm:$0xff]
    %v345 = vld [vmem:[%s11 + $0x60] sm:$0xff]
    %v346 = vld [vmem:[%s11 + $0x68] sm:$0xff]
    %v347 = vld [vmem:[%s11 + $0x70] sm:$0xff]
    %v348 = vld [vmem:[%s11 + $0x78] sm:$0xff]
    %v349 = vld [vmem:[%s11 + $0x80] sm:$0xff]
    %v350 = vld [vmem:[%s11 + $0x88] sm:$0xff]
    %v351 = vld [vmem:[%s11 + $0x90] sm:$0xff]
    %v352 = vld [vmem:[%s11 + $0x98] sm:$0xff]
    %v353 = vld [vmem:[%s11 + $0xa0] sm:$0xff]
    %v354 = vld [vmem:[%s11 + $0xa8] sm:$0xff]
    %v355 = vld [vmem:[%s11 + $0xb0] sm:$0xff]
    %v356 = vld [vmem:[%s11 + $0xb8] sm:$0xff]
    %v357 = vld [vmem:[%s11 + $0xc0] sm:$0xff]
    %v358 = vld [vmem:[%s11 + $0xc8] sm:$0xff]
    %v359 = vld [vmem:[%s11 + $0xd0] sm:$0xff]
    %v360 = vld [vmem:[%s11 + $0xd8] sm:$0xff]
    %v361 = vld [vmem:[%s11 + $0xe0] sm:$0xff]
    %v362 = vld [vmem:[%s11 + $0xe8] sm:$0xff]
    %v363 = vld [vmem:[%s11 + $0xf0] sm:$0xff]
    %v364 = vld [vmem:[%s11 + $0xf8] sm:$0xff]
    %v365 = vld [vmem:[%s11 + $0x100] sm:$0xff]
    %v366 = vld [vmem:[%s11 + $0x108] sm:$0xff]
    %v367 = vld [vmem:[%s11 + $0x110] sm:$0xff]
    %v368 = vld [vmem:[%s11 + $0x118] sm:$0xff]
    %v369 = vld [vmem:[%s11 + $0x120] sm:$0xff]
    %v370 = vld [vmem:[%s11 + $0x128] sm:$0xff]
    %v371 = vld [vmem:[%s11 + $0x130] sm:$0xff]
    %v372 = vld [vmem:[%s11 + $0x138] sm:$0xff]
    %v373 = vld [vmem:[%s11 + $0x140] sm:$0xff]
    %v374 = vld [vmem:[%s11 + $0x148] sm:$0xff]
    %v375 = vld [vmem:[%s11 + $0x150] sm:$0xff]
    %v376 = vld [vmem:[%s11 + $0x158] sm:$0xff]
    %v377 = vld [vmem:[%s11 + $0x160] sm:$0xff]
    %v378 = vld [vmem:[%s11 + $0x168] sm:$0xff]
    %v379 = vld [vmem:[%s11 + $0x170] sm:$0xff]
    %v380 = vld [vmem:[%s11 + $0x178] sm:$0xff]
    %v381 = vld [vmem:[%s12] sm:$0x1]
    %vm382 = vcmask 130048
    %v384 = vsel %vm382, %v91, 0
    %v387 = vsel %vm382, %v92, 0
    %v390 = vsel %vm382, %v93, 0
    %v393 = vsel %vm382, %v94, 0
    %395 = vmatprep.subr.mxu0 0.0
    %396 = vmatpush1.msra.mxu0 %v48
    %397 = vmatprep.subr.mxu0 0.0
    %398 = vmatpush1.msra.mxu0 %v49
    %399 = vmatprep.subr.mxu0 0.0
    %400 = vmatpush1.msra.mxu0 0.0
    %401 = vmatprep.subr.mxu0 0.0
    %402 = vmatpush1.msra.mxu0 0.0
    %403 = vmatprep.subr.mxu0 0.0
    %404 = vmatpush1.msra.mxu0 0.0
    %405 = vmatprep.subr.mxu0 0.0
    %406 = vmatpush1.msra.mxu0 0.0
    %407 = vmatprep.subr.mxu0 0.0
    %408 = vmatpush1.msra.mxu0 0.0
    %409 = vmatprep.subr.mxu0 0.0
    %410 = vmatpush1.msra.mxu0 0.0
    %411 = vmatprep.subr.mxu0 0.0
    %412 = vmatpush1.msra.mxu0 0.0
    %413 = vmatprep.subr.mxu0 0.0
    %414 = vmatpush1.msra.mxu0 0.0
    %415 = vmatprep.subr.mxu0 0.0
    %416 = vmatpush1.msra.mxu0 0.0
    %417 = vmatprep.subr.mxu0 0.0
    %418 = vmatpush1.msra.mxu0 0.0
    %419 = vmatprep.subr.mxu0 0.0
    %420 = vmatpush1.msra.mxu0 0.0
    %421 = vmatprep.subr.mxu0 0.0
    %422 = vmatpush1.msra.mxu0 0.0
    %423 = vmatprep.subr.mxu0 0.0
    %424 = vmatpush1.msra.mxu0 0.0
    %425 = vmatprep.subr.mxu0 0.0
    %426 = vmatpush1.msra.mxu0 0.0
    %427 = vmatprep.subr.mxu0 0.0
    %428 = vmatpush1.msra.mxu0 0.0
    %429 = vmatprep.subr.mxu0 0.0
    %430 = vmatpush1.msra.mxu0 0.0
    %431 = vmatprep.subr.mxu0 0.0
    %432 = vmatpush1.msra.mxu0 0.0
    %433 = vmatprep.subr.mxu0 0.0
    %434 = vmatpush1.msra.mxu0 0.0
    %435 = vmatprep.subr.mxu0 0.0
    %436 = vmatpush1.msra.mxu0 0.0
    %437 = vmatprep.subr.mxu0 0.0
    %438 = vmatpush1.msra.mxu0 0.0
    %439 = vmatprep.subr.mxu0 0.0
    %440 = vmatpush1.msra.mxu0 0.0
    %441 = vmatprep.subr.mxu0 0.0
    %442 = vmatpush1.msra.mxu0 0.0
    %443 = vmatprep.subr.mxu0 0.0
    %444 = vmatpush1.msra.mxu0 0.0
    %445 = vmatprep.subr.mxu0 0.0
    %446 = vmatpush1.msra.mxu0 0.0
    %447 = vmatprep.subr.mxu0 0.0
    %448 = vmatpush1.msra.mxu0 0.0
    %449 = vmatprep.subr.mxu0 0.0
    %450 = vmatpush1.msra.mxu0 0.0
    %451 = vmatprep.subr.mxu0 0.0
    %452 = vmatpush1.msra.mxu0 0.0
    %453 = vmatprep.subr.mxu0 0.0
    %454 = vmatpush1.msra.mxu0 0.0
    %455 = vmatprep.subr.mxu0 0.0
    %456 = vmatpush1.msra.mxu0 0.0
    %457 = vmatprep.subr.mxu0 0.0
    %458 = vmatpush1.msra.mxu0 0.0
    %459 = vmatprep.mubr.f32.mxu0 0.0
    %460 = vmatmul.mubr.f32.gmra.mrb[0].mxu0 %v384
    %v461 = vpop.f32.mrb[0].mxu0
    %v462 = vadd.f32 0.0, %v461
    %v463 = vpop.f32.mrb[0].mxu0
    %464 = vmatprep.mubr.f32.mxu0 0.0
    %465 = vmatmul.mubr.f32.gmra.mrb[0].mxu0 %v387
    %v466 = vpop.f32.mrb[0].mxu0
    %v467 = vadd.f32 0.0, %v466
    %v468 = vpop.f32.mrb[0].mxu0
    %469 = vmatprep.mubr.f32.mxu0 0.0
    %470 = vmatmul.mubr.f32.gmra.mrb[0].mxu0 %v390
    %v471 = vpop.f32.mrb[0].mxu0
    %v472 = vadd.f32 0.0, %v471
    %v473 = vpop.f32.mrb[0].mxu0
    %474 = vmatprep.mubr.f32.mxu0 0.0
    %475 = vmatmul.mubr.f32.gmra.mrb[0].mxu0 %v393
    %v476 = vpop.f32.mrb[0].mxu0
    %v477 = vadd.f32 0.0, %v476
    %v478 = vpop.f32.mrb[0].mxu0
    %479 = vdwg.mxu0
    %v481 = vsel %vm382, %v115, 0
    %v484 = vsel %vm382, %v116, 0
    %v487 = vsel %vm382, %v117, 0
    %v490 = vsel %vm382, %v118, 0
    %492 = vmatprep.subr.mxu0 0.0
    %493 = vmatpush1.msra.mxu0 %v48
    %494 = vmatprep.subr.mxu0 0.0
    %495 = vmatpush1.msra.mxu0 %v49
    %496 = vmatprep.subr.mxu0 0.0
    %497 = vmatpush1.msra.mxu0 0.0
    %498 = vmatprep.subr.mxu0 0.0
    %499 = vmatpush1.msra.mxu0 0.0
    %500 = vmatprep.subr.mxu0 0.0
    %501 = vmatpush1.msra.mxu0 0.0
    %502 = vmatprep.subr.mxu0 0.0
    %503 = vmatpush1.msra.mxu0 0.0
    %504 = vmatprep.subr.mxu0 0.0
    %505 = vmatpush1.msra.mxu0 0.0
    %506 = vmatprep.subr.mxu0 0.0
    %507 = vmatpush1.msra.mxu0 0.0
    %508 = vmatprep.subr.mxu0 0.0
    %509 = vmatpush1.msra.mxu0 0.0
    %510 = vmatprep.subr.mxu0 0.0
    %511 = vmatpush1.msra.mxu0 0.0
    %512 = vmatprep.subr.mxu0 0.0
    %513 = vmatpush1.msra.mxu0 0.0
    %514 = vmatprep.subr.mxu0 0.0
    %515 = vmatpush1.msra.mxu0 0.0
    %516 = vmatprep.subr.mxu0 0.0
    %517 = vmatpush1.msra.mxu0 0.0
    %518 = vmatprep.subr.mxu0 0.0
    %519 = vmatpush1.msra.mxu0 0.0
    %520 = vmatprep.subr.mxu0 0.0
    %521 = vmatpush1.msra.mxu0 0.0
    %522 = vmatprep.subr.mxu0 0.0
    %523 = vmatpush1.msra.mxu0 0.0
    %524 = vmatprep.subr.mxu0 0.0
    %525 = vmatpush1.msra.mxu0 0.0
    %526 = vmatprep.subr.mxu0 0.0
    %527 = vmatpush1.msra.mxu0 0.0
    %528 = vmatprep.subr.mxu0 0.0
    %529 = vmatpush1.msra.mxu0 0.0
    %530 = vmatprep.subr.mxu0 0.0
    %531 = vmatpush1.msra.mxu0 0.0
    %532 = vmatprep.subr.mxu0 0.0
    %533 = vmatpush1.msra.mxu0 0.0
    %534 = vmatprep.subr.mxu0 0.0
    %535 = vmatpush1.msra.mxu0 0.0
    %536 = vmatprep.subr.mxu0 0.0
    %537 = vmatpush1.msra.mxu0 0.0
    %538 = vmatprep.subr.mxu0 0.0
    %539 = vmatpush1.msra.mxu0 0.0
    %540 = vmatprep.subr.mxu0 0.0
    %541 = vmatpush1.msra.mxu0 0.0
    %542 = vmatprep.subr.mxu0 0.0
    %543 = vmatpush1.msra.mxu0 0.0
    %544 = vmatprep.subr.mxu0 0.0
    %545 = vmatpush1.msra.mxu0 0.0
    %546 = vmatprep.subr.mxu0 0.0
    %547 = vmatpush1.msra.mxu0 0.0
    %548 = vmatprep.subr.mxu0 0.0
    %549 = vmatpush1.msra.mxu0 0.0
    %550 = vmatprep.subr.mxu0 0.0
    %551 = vmatpush1.msra.mxu0 0.0
    %552 = vmatprep.subr.mxu0 0.0
    %553 = vmatpush1.msra.mxu0 0.0
    %554 = vmatprep.subr.mxu0 0.0
    %555 = vmatpush1.msra.mxu0 0.0
    %556 = vmatprep.mubr.f32.mxu0 0.0
    %557 = vmatmul.mubr.f32.gmra.mrb[0].mxu0 %v481
    %v558 = vpop.f32.mrb[0].mxu0
    %v559 = vadd.f32 0.0, %v558
    %v560 = vpop.f32.mrb[0].mxu0
    %561 = vmatprep.mubr.f32.mxu0 0.0
    %562 = vmatmul.mubr.f32.gmra.mrb[0].mxu0 %v484
    %v563 = vpop.f32.mrb[0].mxu0
    %v564 = vadd.f32 0.0, %v563
    %v565 = vpop.f32.mrb[0].mxu0
    %566 = vmatprep.mubr.f32.mxu0 0.0
    %567 = vmatmul.mubr.f32.gmra.mrb[0].mxu0 %v487
    %v568 = vpop.f32.mrb[0].mxu0
    %v569 = vadd.f32 0.0, %v568
    %v570 = vpop.f32.mrb[0].mxu0
    %571 = vmatprep.mubr.f32.mxu0 0.0
    %572 = vmatmul.mubr.f32.gmra.mrb[0].mxu0 %v490
    %v573 = vpop.f32.mrb[0].mxu0
    %v574 = vadd.f32 0.0, %v573
    %v575 = vpop.f32.mrb[0].mxu0
    %576 = vdwg.mxu0
    %vm577 = vcmask 15360
    %v579 = vsel %vm577, %v151, 0
    %v582 = vsel %vm577, %v152, 0
    %v585 = vsel %vm577, %v153, 0
    %v588 = vsel %vm577, %v154, 0
    %vm590 = vcmask 1041408
    %v592 = vsel %vm590, %v54, 0
    %594 = vmatprep.subr.mxu0 0.0
    %595 = vmatpush1.msra.mxu0 %v592
    %596 = vmatprep.subr.mxu0 0.0
    %597 = vmatpush1.msra.mxu0 0.0
    %598 = vmatprep.subr.mxu0 0.0
    %599 = vmatpush1.msra.mxu0 0.0
    %600 = vmatprep.subr.mxu0 0.0
    %601 = vmatpush1.msra.mxu0 0.0
    %602 = vmatprep.subr.mxu0 0.0
    %603 = vmatpush1.msra.mxu0 0.0
    %604 = vmatprep.subr.mxu0 0.0
    %605 = vmatpush1.msra.mxu0 0.0
    %606 = vmatprep.subr.mxu0 0.0
    %607 = vmatpush1.msra.mxu0 0.0
    %608 = vmatprep.subr.mxu0 0.0
    %609 = vmatpush1.msra.mxu0 0.0
    %610 = vmatprep.subr.mxu0 0.0
    %611 = vmatpush1.msra.mxu0 0.0
    %612 = vmatprep.subr.mxu0 0.0
    %613 = vmatpush1.msra.mxu0 0.0
    %614 = vmatprep.subr.mxu0 0.0
    %615 = vmatpush1.msra.mxu0 0.0
    %616 = vmatprep.subr.mxu0 0.0
    %617 = vmatpush1.msra.mxu0 0.0
    %618 = vmatprep.subr.mxu0 0.0
    %619 = vmatpush1.msra.mxu0 0.0
    %620 = vmatprep.subr.mxu0 0.0
    %621 = vmatpush1.msra.mxu0 0.0
    %622 = vmatprep.subr.mxu0 0.0
    %623 = vmatpush1.msra.mxu0 0.0
    %624 = vmatprep.subr.mxu0 0.0
    %625 = vmatpush1.msra.mxu0 0.0
    %626 = vmatprep.subr.mxu0 0.0
    %627 = vmatpush1.msra.mxu0 0.0
    %628 = vmatprep.subr.mxu0 0.0
    %629 = vmatpush1.msra.mxu0 0.0
    %630 = vmatprep.subr.mxu0 0.0
    %631 = vmatpush1.msra.mxu0 0.0
    %632 = vmatprep.subr.mxu0 0.0
    %633 = vmatpush1.msra.mxu0 0.0
    %634 = vmatprep.subr.mxu0 0.0
    %635 = vmatpush1.msra.mxu0 0.0
    %636 = vmatprep.subr.mxu0 0.0
    %637 = vmatpush1.msra.mxu0 0.0
    %638 = vmatprep.subr.mxu0 0.0
    %639 = vmatpush1.msra.mxu0 0.0
    %640 = vmatprep.subr.mxu0 0.0
    %641 = vmatpush1.msra.mxu0 0.0
    %642 = vmatprep.subr.mxu0 0.0
    %643 = vmatpush1.msra.mxu0 0.0
    %644 = vmatprep.subr.mxu0 0.0
    %645 = vmatpush1.msra.mxu0 0.0
    %646 = vmatprep.subr.mxu0 0.0
    %647 = vmatpush1.msra.mxu0 0.0
    %648 = vmatprep.subr.mxu0 0.0
    %649 = vmatpush1.msra.mxu0 0.0
    %650 = vmatprep.subr.mxu0 0.0
    %651 = vmatpush1.msra.mxu0 0.0
    %652 = vmatprep.subr.mxu0 0.0
    %653 = vmatpush1.msra.mxu0 0.0
    %654 = vmatprep.subr.mxu0 0.0
    %655 = vmatpush1.msra.mxu0 0.0
    %656 = vmatprep.subr.mxu0 0.0
    %657 = vmatpush1.msra.mxu0 0.0
    %658 = vmatprep.mubr.f32.mxu0 0.0
    %659 = vmatmul.mubr.f32.gmra.mrb[0].mxu0 %v579
    %v660 = vpop.f32.mrb[0].mxu0
    %v661 = vadd.f32 0.0, %v660
    %v662 = vpop.f32.mrb[0].mxu0
    %663 = vmatprep.mubr.f32.mxu0 0.0
    %664 = vmatmul.mubr.f32.gmra.mrb[0].mxu0 %v582
    %v665 = vpop.f32.mrb[0].mxu0
    %v666 = vadd.f32 0.0, %v665
    %v667 = vpop.f32.mrb[0].mxu0
    %668 = vmatprep.mubr.f32.mxu0 0.0
    %669 = vmatmul.mubr.f32.gmra.mrb[0].mxu0 %v585
    %v670 = vpop.f32.mrb[0].mxu0
    %v671 = vadd.f32 0.0, %v670
    %v672 = vpop.f32.mrb[0].mxu0
    %673 = vmatprep.mubr.f32.mxu0 0.0
    %674 = vmatmul.mubr.f32.gmra.mrb[0].mxu0 %v588
    %v675 = vpop.f32.mrb[0].mxu0
    %v676 = vadd.f32 0.0, %v675
    %v677 = vpop.f32.mrb[0].mxu0
    %678 = vdwg.mxu0
    %v680 = vlaneseq
    %v681 = vshrl.u32 %v680, 7
    %v682 = vsub.s32 0, %v681
    %v683 = vrot.slane %v283, %v682
    %685 = vmatprep.subr.mxu0 0.0
    %686 = vmatpush1.msra.mxu0 %v219
    %687 = vmatprep.subr.mxu0 0.0
    %688 = vmatpush1.msra.mxu0 %v220
    %689 = vmatprep.subr.mxu0 0.0
    %690 = vmatpush1.msra.mxu0 %v221
    %691 = vmatprep.subr.mxu0 0.0
    %692 = vmatpush1.msra.mxu0 %v222
    %693 = vmatprep.subr.mxu0 0.0
    %694 = vmatpush1.msra.mxu0 %v223
    %695 = vmatprep.subr.mxu0 0.0
    %696 = vmatpush1.msra.mxu0 %v224
    %697 = vmatprep.subr.mxu0 0.0
    %698 = vmatpush1.msra.mxu0 %v225
    %699 = vmatprep.subr.mxu0 0.0
    %700 = vmatpush1.msra.mxu0 %v226
    %701 = vmatprep.subr.mxu0 0.0
    %702 = vmatpush1.msra.mxu0 %v227
    %703 = vmatprep.subr.mxu0 0.0
    %704 = vmatpush1.msra.mxu0 %v228
    %705 = vmatprep.subr.mxu0 0.0
    %706 = vmatpush1.msra.mxu0 %v229
    %707 = vmatprep.subr.mxu0 0.0
    %708 = vmatpush1.msra.mxu0 %v230
    %709 = vmatprep.subr.mxu0 0.0
    %710 = vmatpush1.msra.mxu0 %v231
    %711 = vmatprep.subr.mxu0 0.0
    %712 = vmatpush1.msra.mxu0 %v232
    %713 = vmatprep.subr.mxu0 0.0
    %714 = vmatpush1.msra.mxu0 %v233
    %715 = vmatprep.subr.mxu0 0.0
    %716 = vmatpush1.msra.mxu0 %v234
    %717 = vmatprep.subr.mxu0 0.0
    %718 = vmatpush1.msra.mxu0 %v235
    %719 = vmatprep.subr.mxu0 0.0
    %720 = vmatpush1.msra.mxu0 %v236
    %721 = vmatprep.subr.mxu0 0.0
    %722 = vmatpush1.msra.mxu0 %v237
    %723 = vmatprep.subr.mxu0 0.0
    %724 = vmatpush1.msra.mxu0 %v238
    %725 = vmatprep.subr.mxu0 0.0
    %726 = vmatpush1.msra.mxu0 %v239
    %727 = vmatprep.subr.mxu0 0.0
    %728 = vmatpush1.msra.mxu0 %v240
    %729 = vmatprep.subr.mxu0 0.0
    %730 = vmatpush1.msra.mxu0 %v241
    %731 = vmatprep.subr.mxu0 0.0
    %732 = vmatpush1.msra.mxu0 %v242
    %733 = vmatprep.subr.mxu0 0.0
    %734 = vmatpush1.msra.mxu0 %v243
    %735 = vmatprep.subr.mxu0 0.0
    %736 = vmatpush1.msra.mxu0 %v244
    %737 = vmatprep.subr.mxu0 0.0
    %738 = vmatpush1.msra.mxu0 %v245
    %739 = vmatprep.subr.mxu0 0.0
    %740 = vmatpush1.msra.mxu0 %v246
    %741 = vmatprep.subr.mxu0 0.0
    %742 = vmatpush1.msra.mxu0 %v247
    %743 = vmatprep.subr.mxu0 0.0
    %744 = vmatpush1.msra.mxu0 %v248
    %745 = vmatprep.subr.mxu0 0.0
    %746 = vmatpush1.msra.mxu0 %v249
    %747 = vmatprep.subr.mxu0 0.0
    %748 = vmatpush1.msra.mxu0 %v250
    %749 = vmatprep.mubr.f32.mxu0 %v559
    %750 = vmatmul.mubr.f32.gmra.mrb[0].mxu0 %v462
    %v751 = vpop.f32.mrb[0].mxu0
    %v752 = vadd.f32 %v683, %v751
    %v753 = vpop.f32.mrb[0].mxu0
    %754 = vmatprep.mubr.f32.mxu0 %v564
    %755 = vmatmul.mubr.f32.gmra.mrb[0].mxu0 %v467
    %v756 = vpop.f32.mrb[0].mxu0
    %v757 = vadd.f32 %v683, %v756
    %v758 = vpop.f32.mrb[0].mxu0
    %759 = vmatprep.mubr.f32.mxu0 %v569
    %760 = vmatmul.mubr.f32.gmra.mrb[0].mxu0 %v472
    %v761 = vpop.f32.mrb[0].mxu0
    %v762 = vadd.f32 %v683, %v761
    %v763 = vpop.f32.mrb[0].mxu0
    %764 = vmatprep.mubr.f32.mxu0 %v574
    %765 = vmatmul.mubr.f32.gmra.mrb[0].mxu0 %v477
    %v766 = vpop.f32.mrb[0].mxu0
    %v767 = vadd.f32 %v683, %v766
    %v768 = vpop.f32.mrb[0].mxu0
    %769 = vdwg.mxu0
    %770 = vmatprep.subr.mxu0 0.0
    %771 = vmatpush1.msra.mxu0 %v251
    %772 = vmatprep.subr.mxu0 0.0
    %773 = vmatpush1.msra.mxu0 %v252
    %774 = vmatprep.subr.mxu0 0.0
    %775 = vmatpush1.msra.mxu0 %v253
    %776 = vmatprep.subr.mxu0 0.0
    %777 = vmatpush1.msra.mxu0 %v254
    %778 = vmatprep.subr.mxu0 0.0
    %779 = vmatpush1.msra.mxu0 %v255
    %780 = vmatprep.subr.mxu0 0.0
    %781 = vmatpush1.msra.mxu0 %v256
    %782 = vmatprep.subr.mxu0 0.0
    %783 = vmatpush1.msra.mxu0 %v257
    %784 = vmatprep.subr.mxu0 0.0
    %785 = vmatpush1.msra.mxu0 %v258
    %786 = vmatprep.subr.mxu0 0.0
    %787 = vmatpush1.msra.mxu0 %v259
    %788 = vmatprep.subr.mxu0 0.0
    %789 = vmatpush1.msra.mxu0 %v260
    %790 = vmatprep.subr.mxu0 0.0
    %791 = vmatpush1.msra.mxu0 %v261
    %792 = vmatprep.subr.mxu0 0.0
    %793 = vmatpush1.msra.mxu0 %v262
    %794 = vmatprep.subr.mxu0 0.0
    %795 = vmatpush1.msra.mxu0 %v263
    %796 = vmatprep.subr.mxu0 0.0
    %797 = vmatpush1.msra.mxu0 %v264
    %798 = vmatprep.subr.mxu0 0.0
    %799 = vmatpush1.msra.mxu0 %v265
    %800 = vmatprep.subr.mxu0 0.0
    %801 = vmatpush1.msra.mxu0 %v266
    %802 = vmatprep.subr.mxu0 0.0
    %803 = vmatpush1.msra.mxu0 %v267
    %804 = vmatprep.subr.mxu0 0.0
    %805 = vmatpush1.msra.mxu0 %v268
    %806 = vmatprep.subr.mxu0 0.0
    %807 = vmatpush1.msra.mxu0 %v269
    %808 = vmatprep.subr.mxu0 0.0
    %809 = vmatpush1.msra.mxu0 %v270
    %810 = vmatprep.subr.mxu0 0.0
    %811 = vmatpush1.msra.mxu0 %v271
    %812 = vmatprep.subr.mxu0 0.0
    %813 = vmatpush1.msra.mxu0 %v272
    %814 = vmatprep.subr.mxu0 0.0
    %815 = vmatpush1.msra.mxu0 %v273
    %816 = vmatprep.subr.mxu0 0.0
    %817 = vmatpush1.msra.mxu0 %v274
    %818 = vmatprep.subr.mxu0 0.0
    %819 = vmatpush1.msra.mxu0 %v275
    %820 = vmatprep.subr.mxu0 0.0
    %821 = vmatpush1.msra.mxu0 %v276
    %822 = vmatprep.subr.mxu0 0.0
    %823 = vmatpush1.msra.mxu0 %v277
    %824 = vmatprep.subr.mxu0 0.0
    %825 = vmatpush1.msra.mxu0 %v278
    %826 = vmatprep.subr.mxu0 0.0
    %827 = vmatpush1.msra.mxu0 %v279
    %828 = vmatprep.subr.mxu0 0.0
    %829 = vmatpush1.msra.mxu0 %v280
    %830 = vmatprep.subr.mxu0 0.0
    %831 = vmatpush1.msra.mxu0 %v281
    %832 = vmatprep.subr.mxu0 0.0
    %833 = vmatpush1.msra.mxu0 %v282
    %834 = vmatprep.mubr.f32.mxu0 %v661
    %835 = vmatmul.mubr.f32.gmra.mrb[0].mxu0 %v50
    %v836 = vpop.f32.mrb[0].mxu0
    %v837 = vadd.f32 %v752, %v836
    %v838 = vpop.f32.mrb[0].mxu0
    %839 = vmatprep.mubr.f32.mxu0 %v666
    %840 = vmatmul.mubr.f32.gmra.mrb[0].mxu0 %v51
    %v841 = vpop.f32.mrb[0].mxu0
    %v842 = vadd.f32 %v757, %v841
    %v843 = vpop.f32.mrb[0].mxu0
    %844 = vmatprep.mubr.f32.mxu0 %v671
    %845 = vmatmul.mubr.f32.gmra.mrb[0].mxu0 %v52
    %v846 = vpop.f32.mrb[0].mxu0
    %v847 = vadd.f32 %v762, %v846
    %v848 = vpop.f32.mrb[0].mxu0
    %849 = vmatprep.mubr.f32.mxu0 %v676
    %850 = vmatmul.mubr.f32.gmra.mrb[0].mxu0 %v53
    %v851 = vpop.f32.mrb[0].mxu0
    %v852 = vadd.f32 %v767, %v851
    %v853 = vpop.f32.mrb[0].mxu0
    %854 = vdwg.mxu0
    %v855 = vmax.f32 %v837, 0.0
    %v856 = vmax.f32 %v842, 0.0
    %v857 = vmax.f32 %v847, 0.0
    %v858 = vmax.f32 %v852, 0.0
    %vm859 = vcmask 261120
    %v861 = vsel %vm859, %v171, 0
    %v864 = vsel %vm859, %v172, 0
    %866 = vmatprep.subr.mxu0 0.0
    %867 = vmatpush1.msra.mxu0 %v855
    %868 = vmatprep.subr.mxu0 0.0
    %869 = vmatpush1.msra.mxu0 %v856
    %870 = vmatprep.subr.mxu0 0.0
    %871 = vmatpush1.msra.mxu0 %v857
    %872 = vmatprep.subr.mxu0 0.0
    %873 = vmatpush1.msra.mxu0 %v858
    %874 = vmatprep.subr.mxu0 0.0
    %875 = vmatpush1.msra.mxu0 0.0
    %876 = vmatprep.subr.mxu0 0.0
    %877 = vmatpush1.msra.mxu0 0.0
    %878 = vmatprep.subr.mxu0 0.0
    %879 = vmatpush1.msra.mxu0 0.0
    %880 = vmatprep.subr.mxu0 0.0
    %881 = vmatpush1.msra.mxu0 0.0
    %882 = vmatprep.subr.mxu0 0.0
    %883 = vmatpush1.msra.mxu0 0.0
    %884 = vmatprep.subr.mxu0 0.0
    %885 = vmatpush1.msra.mxu0 0.0
    %886 = vmatprep.subr.mxu0 0.0
    %887 = vmatpush1.msra.mxu0 0.0
    %888 = vmatprep.subr.mxu0 0.0
    %889 = vmatpush1.msra.mxu0 0.0
    %890 = vmatprep.subr.mxu0 0.0
    %891 = vmatpush1.msra.mxu0 0.0
    %892 = vmatprep.subr.mxu0 0.0
    %893 = vmatpush1.msra.mxu0 0.0
    %894 = vmatprep.subr.mxu0 0.0
    %895 = vmatpush1.msra.mxu0 0.0
    %896 = vmatprep.subr.mxu0 0.0
    %897 = vmatpush1.msra.mxu0 0.0
    %898 = vmatprep.subr.mxu0 0.0
    %899 = vmatpush1.msra.mxu0 0.0
    %900 = vmatprep.subr.mxu0 0.0
    %901 = vmatpush1.msra.mxu0 0.0
    %902 = vmatprep.subr.mxu0 0.0
    %903 = vmatpush1.msra.mxu0 0.0
    %904 = vmatprep.subr.mxu0 0.0
    %905 = vmatpush1.msra.mxu0 0.0
    %906 = vmatprep.subr.mxu0 0.0
    %907 = vmatpush1.msra.mxu0 0.0
    %908 = vmatprep.subr.mxu0 0.0
    %909 = vmatpush1.msra.mxu0 0.0
    %910 = vmatprep.subr.mxu0 0.0
    %911 = vmatpush1.msra.mxu0 0.0
    %912 = vmatprep.subr.mxu0 0.0
    %913 = vmatpush1.msra.mxu0 0.0
    %914 = vmatprep.subr.mxu0 0.0
    %915 = vmatpush1.msra.mxu0 0.0
    %916 = vmatprep.subr.mxu0 0.0
    %917 = vmatpush1.msra.mxu0 0.0
    %918 = vmatprep.subr.mxu0 0.0
    %919 = vmatpush1.msra.mxu0 0.0
    %920 = vmatprep.subr.mxu0 0.0
    %921 = vmatpush1.msra.mxu0 0.0
    %922 = vmatprep.subr.mxu0 0.0
    %923 = vmatpush1.msra.mxu0 0.0
    %924 = vmatprep.subr.mxu0 0.0
    %925 = vmatpush1.msra.mxu0 0.0
    %926 = vmatprep.subr.mxu0 0.0
    %927 = vmatpush1.msra.mxu0 0.0
    %928 = vmatprep.subr.mxu0 0.0
    %929 = vmatpush1.msra.mxu0 0.0
    %930 = vmatprep.mubr.f32.mxu0 0.0
    %931 = vmatmul.mubr.f32.gmra.mrb[0].mxu0 %v861
    %v932 = vpop.f32.mrb[0].mxu0
    %v933 = vadd.f32 0.0, %v932
    %v934 = vpop.f32.mrb[0].mxu0
    %935 = vmatprep.mubr.f32.mxu0 0.0
    %936 = vmatmul.mubr.f32.gmra.mrb[0].mxu0 %v864
    %v937 = vpop.f32.mrb[0].mxu0
    %v938 = vadd.f32 0.0, %v937
    %v939 = vpop.f32.mrb[0].mxu0
    %940 = vdwg.mxu0
    %v942 = vsel %vm577, %v129, 0
    %v945 = vsel %vm577, %v130, 0
    %947 = vmatprep.subr.mxu0 0.0
    %948 = vmatpush1.msra.mxu0 %v592
    %949 = vmatprep.subr.mxu0 0.0
    %950 = vmatpush1.msra.mxu0 0.0
    %951 = vmatprep.subr.mxu0 0.0
    %952 = vmatpush1.msra.mxu0 0.0
    %953 = vmatprep.subr.mxu0 0.0
    %954 = vmatpush1.msra.mxu0 0.0
    %955 = vmatprep.subr.mxu0 0.0
    %956 = vmatpush1.msra.mxu0 0.0
    %957 = vmatprep.subr.mxu0 0.0
    %958 = vmatpush1.msra.mxu0 0.0
    %959 = vmatprep.subr.mxu0 0.0
    %960 = vmatpush1.msra.mxu0 0.0
    %961 = vmatprep.subr.mxu0 0.0
    %962 = vmatpush1.msra.mxu0 0.0
    %963 = vmatprep.subr.mxu0 0.0
    %964 = vmatpush1.msra.mxu0 0.0
    %965 = vmatprep.subr.mxu0 0.0
    %966 = vmatpush1.msra.mxu0 0.0
    %967 = vmatprep.subr.mxu0 0.0
    %968 = vmatpush1.msra.mxu0 0.0
    %969 = vmatprep.subr.mxu0 0.0
    %970 = vmatpush1.msra.mxu0 0.0
    %971 = vmatprep.subr.mxu0 0.0
    %972 = vmatpush1.msra.mxu0 0.0
    %973 = vmatprep.subr.mxu0 0.0
    %974 = vmatpush1.msra.mxu0 0.0
    %975 = vmatprep.subr.mxu0 0.0
    %976 = vmatpush1.msra.mxu0 0.0
    %977 = vmatprep.subr.mxu0 0.0
    %978 = vmatpush1.msra.mxu0 0.0
    %979 = vmatprep.subr.mxu0 0.0
    %980 = vmatpush1.msra.mxu0 0.0
    %981 = vmatprep.subr.mxu0 0.0
    %982 = vmatpush1.msra.mxu0 0.0
    %983 = vmatprep.subr.mxu0 0.0
    %984 = vmatpush1.msra.mxu0 0.0
    %985 = vmatprep.subr.mxu0 0.0
    %986 = vmatpush1.msra.mxu0 0.0
    %987 = vmatprep.subr.mxu0 0.0
    %988 = vmatpush1.msra.mxu0 0.0
    %989 = vmatprep.subr.mxu0 0.0
    %990 = vmatpush1.msra.mxu0 0.0
    %991 = vmatprep.subr.mxu0 0.0
    %992 = vmatpush1.msra.mxu0 0.0
    %993 = vmatprep.subr.mxu0 0.0
    %994 = vmatpush1.msra.mxu0 0.0
    %995 = vmatprep.subr.mxu0 0.0
    %996 = vmatpush1.msra.mxu0 0.0
    %997 = vmatprep.subr.mxu0 0.0
    %998 = vmatpush1.msra.mxu0 0.0
    %999 = vmatprep.subr.mxu0 0.0
    %1000 = vmatpush1.msra.mxu0 0.0
    %1001 = vmatprep.subr.mxu0 0.0
    %1002 = vmatpush1.msra.mxu0 0.0
    %1003 = vmatprep.subr.mxu0 0.0
    %1004 = vmatpush1.msra.mxu0 0.0
    %1005 = vmatprep.subr.mxu0 0.0
    %1006 = vmatpush1.msra.mxu0 0.0
    %1007 = vmatprep.subr.mxu0 0.0
    %1008 = vmatpush1.msra.mxu0 0.0
    %1009 = vmatprep.subr.mxu0 0.0
    %1010 = vmatpush1.msra.mxu0 0.0
    %1011 = vmatprep.mubr.f32.mxu0 0.0
    %1012 = vmatmul.mubr.f32.gmra.mrb[0].mxu0 %v942
    %v1013 = vpop.f32.mrb[0].mxu0
    %v1014 = vadd.f32 0.0, %v1013
    %v1015 = vpop.f32.mrb[0].mxu0
    %1016 = vmatprep.mubr.f32.mxu0 0.0
    %1017 = vmatmul.mubr.f32.gmra.mrb[0].mxu0 %v945
    %v1018 = vpop.f32.mrb[0].mxu0
    %v1019 = vadd.f32 0.0, %v1018
    %v1020 = vpop.f32.mrb[0].mxu0
    %1021 = vdwg.mxu0
    %v1023 = vlaneseq
    %v1024 = vshrl.u32 %v1023, 7
    %v1025 = vsub.s32 0, %v1024
    %v1026 = vrot.slane %v332, %v1025
    %1028 = vmatprep.subr.mxu0 0.0
    %1029 = vmatpush1.msra.mxu0 %v284
    %1030 = vmatprep.subr.mxu0 0.0
    %1031 = vmatpush1.msra.mxu0 %v285
    %1032 = vmatprep.subr.mxu0 0.0
    %1033 = vmatpush1.msra.mxu0 %v286
    %1034 = vmatprep.subr.mxu0 0.0
    %1035 = vmatpush1.msra.mxu0 %v287
    %1036 = vmatprep.subr.mxu0 0.0
    %1037 = vmatpush1.msra.mxu0 %v288
    %1038 = vmatprep.subr.mxu0 0.0
    %1039 = vmatpush1.msra.mxu0 %v289
    %1040 = vmatprep.subr.mxu0 0.0
    %1041 = vmatpush1.msra.mxu0 %v290
    %1042 = vmatprep.subr.mxu0 0.0
    %1043 = vmatpush1.msra.mxu0 %v291
    %1044 = vmatprep.subr.mxu0 0.0
    %1045 = vmatpush1.msra.mxu0 %v292
    %1046 = vmatprep.subr.mxu0 0.0
    %1047 = vmatpush1.msra.mxu0 %v293
    %1048 = vmatprep.subr.mxu0 0.0
    %1049 = vmatpush1.msra.mxu0 %v294
    %1050 = vmatprep.subr.mxu0 0.0
    %1051 = vmatpush1.msra.mxu0 %v295
    %1052 = vmatprep.subr.mxu0 0.0
    %1053 = vmatpush1.msra.mxu0 %v296
    %1054 = vmatprep.subr.mxu0 0.0
    %1055 = vmatpush1.msra.mxu0 %v297
    %1056 = vmatprep.subr.mxu0 0.0
    %1057 = vmatpush1.msra.mxu0 %v298
    %1058 = vmatprep.subr.mxu0 0.0
    %1059 = vmatpush1.msra.mxu0 %v299
    %1060 = vmatprep.subr.mxu0 0.0
    %1061 = vmatpush1.msra.mxu0 %v300
    %1062 = vmatprep.subr.mxu0 0.0
    %1063 = vmatpush1.msra.mxu0 %v301
    %1064 = vmatprep.subr.mxu0 0.0
    %1065 = vmatpush1.msra.mxu0 %v302
    %1066 = vmatprep.subr.mxu0 0.0
    %1067 = vmatpush1.msra.mxu0 %v303
    %1068 = vmatprep.subr.mxu0 0.0
    %1069 = vmatpush1.msra.mxu0 %v304
    %1070 = vmatprep.subr.mxu0 0.0
    %1071 = vmatpush1.msra.mxu0 %v305
    %1072 = vmatprep.subr.mxu0 0.0
    %1073 = vmatpush1.msra.mxu0 %v306
    %1074 = vmatprep.subr.mxu0 0.0
    %1075 = vmatpush1.msra.mxu0 %v307
    %1076 = vmatprep.subr.mxu0 0.0
    %1077 = vmatpush1.msra.mxu0 %v308
    %1078 = vmatprep.subr.mxu0 0.0
    %1079 = vmatpush1.msra.mxu0 %v309
    %1080 = vmatprep.subr.mxu0 0.0
    %1081 = vmatpush1.msra.mxu0 %v310
    %1082 = vmatprep.subr.mxu0 0.0
    %1083 = vmatpush1.msra.mxu0 %v311
    %1084 = vmatprep.subr.mxu0 0.0
    %1085 = vmatpush1.msra.mxu0 %v312
    %1086 = vmatprep.subr.mxu0 0.0
    %1087 = vmatpush1.msra.mxu0 %v313
    %1088 = vmatprep.subr.mxu0 0.0
    %1089 = vmatpush1.msra.mxu0 %v314
    %1090 = vmatprep.subr.mxu0 0.0
    %1091 = vmatpush1.msra.mxu0 %v315
    %1092 = vmatprep.mubr.f32.mxu0 %v933
    %1093 = vmatmul.mubr.f32.gmra.mrb[0].mxu0 %v48
    %v1094 = vpop.f32.mrb[0].mxu0
    %v1095 = vadd.f32 %v1026, %v1094
    %v1096 = vpop.f32.mrb[0].mxu0
    %1097 = vmatprep.mubr.f32.mxu0 %v938
    %1098 = vmatmul.mubr.f32.gmra.mrb[0].mxu0 %v49
    %v1099 = vpop.f32.mrb[0].mxu0
    %v1100 = vadd.f32 %v1026, %v1099
    %v1101 = vpop.f32.mrb[0].mxu0
    %1102 = vdwg.mxu0
    %1103 = vmatprep.subr.mxu0 0.0
    %1104 = vmatpush1.msra.mxu0 %v316
    %1105 = vmatprep.subr.mxu0 0.0
    %1106 = vmatpush1.msra.mxu0 %v317
    %1107 = vmatprep.subr.mxu0 0.0
    %1108 = vmatpush1.msra.mxu0 %v318
    %1109 = vmatprep.subr.mxu0 0.0
    %1110 = vmatpush1.msra.mxu0 %v319
    %1111 = vmatprep.subr.mxu0 0.0
    %1112 = vmatpush1.msra.mxu0 %v320
    %1113 = vmatprep.subr.mxu0 0.0
    %1114 = vmatpush1.msra.mxu0 %v321
    %1115 = vmatprep.subr.mxu0 0.0
    %1116 = vmatpush1.msra.mxu0 %v322
    %1117 = vmatprep.subr.mxu0 0.0
    %1118 = vmatpush1.msra.mxu0 %v323
    %1119 = vmatprep.subr.mxu0 0.0
    %1120 = vmatpush1.msra.mxu0 %v324
    %1121 = vmatprep.subr.mxu0 0.0
    %1122 = vmatpush1.msra.mxu0 %v325
    %1123 = vmatprep.subr.mxu0 0.0
    %1124 = vmatpush1.msra.mxu0 %v326
    %1125 = vmatprep.subr.mxu0 0.0
    %1126 = vmatpush1.msra.mxu0 %v327
    %1127 = vmatprep.subr.mxu0 0.0
    %1128 = vmatpush1.msra.mxu0 %v328
    %1129 = vmatprep.subr.mxu0 0.0
    %1130 = vmatpush1.msra.mxu0 %v329
    %1131 = vmatprep.subr.mxu0 0.0
    %1132 = vmatpush1.msra.mxu0 %v330
    %1133 = vmatprep.subr.mxu0 0.0
    %1134 = vmatpush1.msra.mxu0 %v331
    %1135 = vmatprep.subr.mxu0 0.0
    %1136 = vmatpush1.msra.mxu0 0.0
    %1137 = vmatprep.subr.mxu0 0.0
    %1138 = vmatpush1.msra.mxu0 0.0
    %1139 = vmatprep.subr.mxu0 0.0
    %1140 = vmatpush1.msra.mxu0 0.0
    %1141 = vmatprep.subr.mxu0 0.0
    %1142 = vmatpush1.msra.mxu0 0.0
    %1143 = vmatprep.subr.mxu0 0.0
    %1144 = vmatpush1.msra.mxu0 0.0
    %1145 = vmatprep.subr.mxu0 0.0
    %1146 = vmatpush1.msra.mxu0 0.0
    %1147 = vmatprep.subr.mxu0 0.0
    %1148 = vmatpush1.msra.mxu0 0.0
    %1149 = vmatprep.subr.mxu0 0.0
    %1150 = vmatpush1.msra.mxu0 0.0
    %1151 = vmatprep.subr.mxu0 0.0
    %1152 = vmatpush1.msra.mxu0 0.0
    %1153 = vmatprep.subr.mxu0 0.0
    %1154 = vmatpush1.msra.mxu0 0.0
    %1155 = vmatprep.subr.mxu0 0.0
    %1156 = vmatpush1.msra.mxu0 0.0
    %1157 = vmatprep.subr.mxu0 0.0
    %1158 = vmatpush1.msra.mxu0 0.0
    %1159 = vmatprep.subr.mxu0 0.0
    %1160 = vmatpush1.msra.mxu0 0.0
    %1161 = vmatprep.subr.mxu0 0.0
    %1162 = vmatpush1.msra.mxu0 0.0
    %1163 = vmatprep.subr.mxu0 0.0
    %1164 = vmatpush1.msra.mxu0 0.0
    %1165 = vmatprep.subr.mxu0 0.0
    %1166 = vmatpush1.msra.mxu0 0.0
    %1167 = vmatprep.mubr.f32.mxu0 0.0
    %1168 = vmatmul.mubr.f32.gmra.mrb[0].mxu0 %v1014
    %v1169 = vpop.f32.mrb[0].mxu0
    %v1170 = vadd.f32 %v1095, %v1169
    %v1171 = vpop.f32.mrb[0].mxu0
    %1172 = vmatprep.mubr.f32.mxu0 0.0
    %1173 = vmatmul.mubr.f32.gmra.mrb[0].mxu0 %v1019
    %v1174 = vpop.f32.mrb[0].mxu0
    %v1175 = vadd.f32 %v1100, %v1174
    %v1176 = vpop.f32.mrb[0].mxu0
    %1177 = vdwg.mxu0
    %v1178 = vmax.f32 %v1170, 0.0
    %v1179 = vmax.f32 %v1175, 0.0
    %v1181 = vsel %vm382, %v203, 0
    %1183 = vmatprep.subr.mxu0 0.0
    %1184 = vmatpush1.msra.mxu0 %v1178
    %1185 = vmatprep.subr.mxu0 0.0
    %1186 = vmatpush1.msra.mxu0 %v1179
    %1187 = vmatprep.subr.mxu0 0.0
    %1188 = vmatpush1.msra.mxu0 0.0
    %1189 = vmatprep.subr.mxu0 0.0
    %1190 = vmatpush1.msra.mxu0 0.0
    %1191 = vmatprep.subr.mxu0 0.0
    %1192 = vmatpush1.msra.mxu0 0.0
    %1193 = vmatprep.subr.mxu0 0.0
    %1194 = vmatpush1.msra.mxu0 0.0
    %1195 = vmatprep.subr.mxu0 0.0
    %1196 = vmatpush1.msra.mxu0 0.0
    %1197 = vmatprep.subr.mxu0 0.0
    %1198 = vmatpush1.msra.mxu0 0.0
    %1199 = vmatprep.subr.mxu0 0.0
    %1200 = vmatpush1.msra.mxu0 0.0
    %1201 = vmatprep.subr.mxu0 0.0
    %1202 = vmatpush1.msra.mxu0 0.0
    %1203 = vmatprep.subr.mxu0 0.0
    %1204 = vmatpush1.msra.mxu0 0.0
    %1205 = vmatprep.subr.mxu0 0.0
    %1206 = vmatpush1.msra.mxu0 0.0
    %1207 = vmatprep.subr.mxu0 0.0
    %1208 = vmatpush1.msra.mxu0 0.0
    %1209 = vmatprep.subr.mxu0 0.0
    %1210 = vmatpush1.msra.mxu0 0.0
    %1211 = vmatprep.subr.mxu0 0.0
    %1212 = vmatpush1.msra.mxu0 0.0
    %1213 = vmatprep.subr.mxu0 0.0
    %1214 = vmatpush1.msra.mxu0 0.0
    %1215 = vmatprep.subr.mxu0 0.0
    %1216 = vmatpush1.msra.mxu0 0.0
    %1217 = vmatprep.subr.mxu0 0.0
    %1218 = vmatpush1.msra.mxu0 0.0
    %1219 = vmatprep.subr.mxu0 0.0
    %1220 = vmatpush1.msra.mxu0 0.0
    %1221 = vmatprep.subr.mxu0 0.0
    %1222 = vmatpush1.msra.mxu0 0.0
    %1223 = vmatprep.subr.mxu0 0.0
    %1224 = vmatpush1.msra.mxu0 0.0
    %1225 = vmatprep.subr.mxu0 0.0
    %1226 = vmatpush1.msra.mxu0 0.0
    %1227 = vmatprep.subr.mxu0 0.0
    %1228 = vmatpush1.msra.mxu0 0.0
    %1229 = vmatprep.subr.mxu0 0.0
    %1230 = vmatpush1.msra.mxu0 0.0
    %1231 = vmatprep.subr.mxu0 0.0
    %1232 = vmatpush1.msra.mxu0 0.0
    %1233 = vmatprep.subr.mxu0 0.0
    %1234 = vmatpush1.msra.mxu0 0.0
    %1235 = vmatprep.subr.mxu0 0.0
    %1236 = vmatpush1.msra.mxu0 0.0
    %1237 = vmatprep.subr.mxu0 0.0
    %1238 = vmatpush1.msra.mxu0 0.0
    %1239 = vmatprep.subr.mxu0 0.0
    %1240 = vmatpush1.msra.mxu0 0.0
    %1241 = vmatprep.subr.mxu0 0.0
    %1242 = vmatpush1.msra.mxu0 0.0
    %1243 = vmatprep.subr.mxu0 0.0
    %1244 = vmatpush1.msra.mxu0 0.0
    %1245 = vmatprep.subr.mxu0 0.0
    %1246 = vmatpush1.msra.mxu0 0.0
    %1247 = vmatprep.mubr.f32.mxu0 0.0
    %1248 = vmatmul.mubr.f32.gmra.mrb[0].mxu0 %v1181
    %v1249 = vpop.f32.mrb[0].mxu0
    %v1250 = vadd.f32 0.0, %v1249
    %v1251 = vpop.f32.mrb[0].mxu0
    %1252 = vdwg.mxu0
    %1253 = vmatprep.subr.mxu0 0.0
    %1254 = vmatpush1.msra.mxu0 %v933
    %1255 = vmatprep.subr.mxu0 0.0
    %1256 = vmatpush1.msra.mxu0 %v938
    %1257 = vmatprep.subr.mxu0 0.0
    %1258 = vmatpush1.msra.mxu0 0.0
    %1259 = vmatprep.subr.mxu0 0.0
    %1260 = vmatpush1.msra.mxu0 0.0
    %1261 = vmatprep.subr.mxu0 0.0
    %1262 = vmatpush1.msra.mxu0 0.0
    %1263 = vmatprep.subr.mxu0 0.0
    %1264 = vmatpush1.msra.mxu0 0.0
    %1265 = vmatprep.subr.mxu0 0.0
    %1266 = vmatpush1.msra.mxu0 0.0
    %1267 = vmatprep.subr.mxu0 0.0
    %1268 = vmatpush1.msra.mxu0 0.0
    %1269 = vmatprep.subr.mxu0 0.0
    %1270 = vmatpush1.msra.mxu0 0.0
    %1271 = vmatprep.subr.mxu0 0.0
    %1272 = vmatpush1.msra.mxu0 0.0
    %1273 = vmatprep.subr.mxu0 0.0
    %1274 = vmatpush1.msra.mxu0 0.0
    %1275 = vmatprep.subr.mxu0 0.0
    %1276 = vmatpush1.msra.mxu0 0.0
    %1277 = vmatprep.subr.mxu0 0.0
    %1278 = vmatpush1.msra.mxu0 0.0
    %1279 = vmatprep.subr.mxu0 0.0
    %1280 = vmatpush1.msra.mxu0 0.0
    %1281 = vmatprep.subr.mxu0 0.0
    %1282 = vmatpush1.msra.mxu0 0.0
    %1283 = vmatprep.subr.mxu0 0.0
    %1284 = vmatpush1.msra.mxu0 0.0
    %1285 = vmatprep.subr.mxu0 0.0
    %1286 = vmatpush1.msra.mxu0 0.0
    %1287 = vmatprep.subr.mxu0 0.0
    %1288 = vmatpush1.msra.mxu0 0.0
    %1289 = vmatprep.subr.mxu0 0.0
    %1290 = vmatpush1.msra.mxu0 0.0
    %1291 = vmatprep.subr.mxu0 0.0
    %1292 = vmatpush1.msra.mxu0 0.0
    %1293 = vmatprep.subr.mxu0 0.0
    %1294 = vmatpush1.msra.mxu0 0.0
    %1295 = vmatprep.subr.mxu0 0.0
    %1296 = vmatpush1.msra.mxu0 0.0
    %1297 = vmatprep.subr.mxu0 0.0
    %1298 = vmatpush1.msra.mxu0 0.0
    %1299 = vmatprep.subr.mxu0 0.0
    %1300 = vmatpush1.msra.mxu0 0.0
    %1301 = vmatprep.subr.mxu0 0.0
    %1302 = vmatpush1.msra.mxu0 0.0
    %1303 = vmatprep.subr.mxu0 0.0
    %1304 = vmatpush1.msra.mxu0 0.0
    %1305 = vmatprep.subr.mxu0 0.0
    %1306 = vmatpush1.msra.mxu0 0.0
    %1307 = vmatprep.subr.mxu0 0.0
    %1308 = vmatpush1.msra.mxu0 0.0
    %1309 = vmatprep.subr.mxu0 0.0
    %1310 = vmatpush1.msra.mxu0 0.0
    %1311 = vmatprep.subr.mxu0 0.0
    %1312 = vmatpush1.msra.mxu0 0.0
    %1313 = vmatprep.subr.mxu0 0.0
    %1314 = vmatpush1.msra.mxu0 0.0
    %1315 = vmatprep.subr.mxu0 0.0
    %1316 = vmatpush1.msra.mxu0 0.0
    %1317 = vmatprep.mubr.f32.mxu0 0.0
    %1318 = vmatmul.mubr.f32.gmra.mrb[0].mxu0 %v1181
    %v1319 = vpop.f32.mrb[0].mxu0
    %v1320 = vadd.f32 0.0, %v1319
    %v1321 = vpop.f32.mrb[0].mxu0
    %1322 = vdwg.mxu0
    %v1324 = vlaneseq
    %v1325 = vshrl.u32 %v1324, 7
    %v1326 = vsub.s32 0, %v1325
    %v1327 = vrot.slane %v381, %v1326
    %1329 = vmatprep.subr.mxu0 0.0
    %1330 = vmatpush1.msra.mxu0 %v333
    %1331 = vmatprep.subr.mxu0 0.0
    %1332 = vmatpush1.msra.mxu0 %v334
    %1333 = vmatprep.subr.mxu0 0.0
    %1334 = vmatpush1.msra.mxu0 %v335
    %1335 = vmatprep.subr.mxu0 0.0
    %1336 = vmatpush1.msra.mxu0 %v336
    %1337 = vmatprep.subr.mxu0 0.0
    %1338 = vmatpush1.msra.mxu0 %v337
    %1339 = vmatprep.subr.mxu0 0.0
    %1340 = vmatpush1.msra.mxu0 %v338
    %1341 = vmatprep.subr.mxu0 0.0
    %1342 = vmatpush1.msra.mxu0 %v339
    %1343 = vmatprep.subr.mxu0 0.0
    %1344 = vmatpush1.msra.mxu0 %v340
    %1345 = vmatprep.subr.mxu0 0.0
    %1346 = vmatpush1.msra.mxu0 %v341
    %1347 = vmatprep.subr.mxu0 0.0
    %1348 = vmatpush1.msra.mxu0 %v342
    %1349 = vmatprep.subr.mxu0 0.0
    %1350 = vmatpush1.msra.mxu0 %v343
    %1351 = vmatprep.subr.mxu0 0.0
    %1352 = vmatpush1.msra.mxu0 %v344
    %1353 = vmatprep.subr.mxu0 0.0
    %1354 = vmatpush1.msra.mxu0 %v345
    %1355 = vmatprep.subr.mxu0 0.0
    %1356 = vmatpush1.msra.mxu0 %v346
    %1357 = vmatprep.subr.mxu0 0.0
    %1358 = vmatpush1.msra.mxu0 %v347
    %1359 = vmatprep.subr.mxu0 0.0
    %1360 = vmatpush1.msra.mxu0 %v348
    %1361 = vmatprep.subr.mxu0 0.0
    %1362 = vmatpush1.msra.mxu0 %v349
    %1363 = vmatprep.subr.mxu0 0.0
    %1364 = vmatpush1.msra.mxu0 %v350
    %1365 = vmatprep.subr.mxu0 0.0
    %1366 = vmatpush1.msra.mxu0 %v351
    %1367 = vmatprep.subr.mxu0 0.0
    %1368 = vmatpush1.msra.mxu0 %v352
    %1369 = vmatprep.subr.mxu0 0.0
    %1370 = vmatpush1.msra.mxu0 %v353
    %1371 = vmatprep.subr.mxu0 0.0
    %1372 = vmatpush1.msra.mxu0 %v354
    %1373 = vmatprep.subr.mxu0 0.0
    %1374 = vmatpush1.msra.mxu0 %v355
    %1375 = vmatprep.subr.mxu0 0.0
    %1376 = vmatpush1.msra.mxu0 %v356
    %1377 = vmatprep.subr.mxu0 0.0
    %1378 = vmatpush1.msra.mxu0 %v357
    %1379 = vmatprep.subr.mxu0 0.0
    %1380 = vmatpush1.msra.mxu0 %v358
    %1381 = vmatprep.subr.mxu0 0.0
    %1382 = vmatpush1.msra.mxu0 %v359
    %1383 = vmatprep.subr.mxu0 0.0
    %1384 = vmatpush1.msra.mxu0 %v360
    %1385 = vmatprep.subr.mxu0 0.0
    %1386 = vmatpush1.msra.mxu0 %v361
    %1387 = vmatprep.subr.mxu0 0.0
    %1388 = vmatpush1.msra.mxu0 %v362
    %1389 = vmatprep.subr.mxu0 0.0
    %1390 = vmatpush1.msra.mxu0 %v363
    %1391 = vmatprep.subr.mxu0 0.0
    %1392 = vmatpush1.msra.mxu0 %v364
    %1393 = vmatprep.mubr.f32.mxu0 %v1320
    %1394 = vmatmul.mubr.f32.gmra.mrb[0].mxu0 %v1250
    %v1395 = vpop.f32.mrb[0].mxu0
    %v1396 = vadd.f32 %v1327, %v1395
    %v1397 = vpop.f32.mrb[0].mxu0
    %1398 = vdwg.mxu0
    %1399 = vmatprep.subr.mxu0 0.0
    %1400 = vmatpush1.msra.mxu0 %v365
    %1401 = vmatprep.subr.mxu0 0.0
    %1402 = vmatpush1.msra.mxu0 %v366
    %1403 = vmatprep.subr.mxu0 0.0
    %1404 = vmatpush1.msra.mxu0 %v367
    %1405 = vmatprep.subr.mxu0 0.0
    %1406 = vmatpush1.msra.mxu0 %v368
    %1407 = vmatprep.subr.mxu0 0.0
    %1408 = vmatpush1.msra.mxu0 %v369
    %1409 = vmatprep.subr.mxu0 0.0
    %1410 = vmatpush1.msra.mxu0 %v370
    %1411 = vmatprep.subr.mxu0 0.0
    %1412 = vmatpush1.msra.mxu0 %v371
    %1413 = vmatprep.subr.mxu0 0.0
    %1414 = vmatpush1.msra.mxu0 %v372
    %1415 = vmatprep.subr.mxu0 0.0
    %1416 = vmatpush1.msra.mxu0 %v373
    %1417 = vmatprep.subr.mxu0 0.0
    %1418 = vmatpush1.msra.mxu0 %v374
    %1419 = vmatprep.subr.mxu0 0.0
    %1420 = vmatpush1.msra.mxu0 %v375
    %1421 = vmatprep.subr.mxu0 0.0
    %1422 = vmatpush1.msra.mxu0 %v376
    %1423 = vmatprep.subr.mxu0 0.0
    %1424 = vmatpush1.msra.mxu0 %v377
    %1425 = vmatprep.subr.mxu0 0.0
    %1426 = vmatpush1.msra.mxu0 %v378
    %1427 = vmatprep.subr.mxu0 0.0
    %1428 = vmatpush1.msra.mxu0 %v379
    %1429 = vmatprep.subr.mxu0 0.0
    %1430 = vmatpush1.msra.mxu0 %v380
    %1431 = vmatprep.subr.mxu0 0.0
    %1432 = vmatpush1.msra.mxu0 0.0
    %1433 = vmatprep.subr.mxu0 0.0
    %1434 = vmatpush1.msra.mxu0 0.0
    %1435 = vmatprep.subr.mxu0 0.0
    %1436 = vmatpush1.msra.mxu0 0.0
    %1437 = vmatprep.subr.mxu0 0.0
    %1438 = vmatpush1.msra.mxu0 0.0
    %1439 = vmatprep.subr.mxu0 0.0
    %1440 = vmatpush1.msra.mxu0 0.0
    %1441 = vmatprep.subr.mxu0 0.0
    %1442 = vmatpush1.msra.mxu0 0.0
    %1443 = vmatprep.subr.mxu0 0.0
    %1444 = vmatpush1.msra.mxu0 0.0
    %1445 = vmatprep.subr.mxu0 0.0
    %1446 = vmatpush1.msra.mxu0 0.0
    %1447 = vmatprep.subr.mxu0 0.0
    %1448 = vmatpush1.msra.mxu0 0.0
    %1449 = vmatprep.subr.mxu0 0.0
    %1450 = vmatpush1.msra.mxu0 0.0
    %1451 = vmatprep.subr.mxu0 0.0
    %1452 = vmatpush1.msra.mxu0 0.0
    %1453 = vmatprep.subr.mxu0 0.0
    %1454 = vmatpush1.msra.mxu0 0.0
    %1455 = vmatprep.subr.mxu0 0.0
    %1456 = vmatpush1.msra.mxu0 0.0
    %1457 = vmatprep.subr.mxu0 0.0
    %1458 = vmatpush1.msra.mxu0 0.0
    %1459 = vmatprep.subr.mxu0 0.0
    %1460 = vmatpush1.msra.mxu0 0.0
    %1461 = vmatprep.subr.mxu0 0.0
    %1462 = vmatpush1.msra.mxu0 0.0
    %1463 = vmatprep.mubr.f32.mxu0 0.0
    %1464 = vmatmul.mubr.f32.gmra.mrb[0].mxu0 %v54
    %v1465 = vpop.f32.mrb[0].mxu0
    %v1466 = vadd.f32 %v1396, %v1465
    %v1467 = vpop.f32.mrb[0].mxu0
    %1468 = vdwg.mxu0
    %v1469 = vmax.f32 %v1466, 0.0
    %1470 = vmatprep.subr.mxu0 0.0
    %1471 = vmatpush1.msra.mxu0 %v1178
    %1472 = vmatprep.subr.mxu0 0.0
    %1473 = vmatpush1.msra.mxu0 %v1179
    %1474 = vmatprep.subr.mxu0 0.0
    %1475 = vmatpush1.msra.mxu0 0.0
    %1476 = vmatprep.subr.mxu0 0.0
    %1477 = vmatpush1.msra.mxu0 0.0
    %1478 = vmatprep.subr.mxu0 0.0
    %1479 = vmatpush1.msra.mxu0 0.0
    %1480 = vmatprep.subr.mxu0 0.0
    %1481 = vmatpush1.msra.mxu0 0.0
    %1482 = vmatprep.subr.mxu0 0.0
    %1483 = vmatpush1.msra.mxu0 0.0
    %1484 = vmatprep.subr.mxu0 0.0
    %1485 = vmatpush1.msra.mxu0 0.0
    %1486 = vmatprep.subr.mxu0 0.0
    %1487 = vmatpush1.msra.mxu0 0.0
    %1488 = vmatprep.subr.mxu0 0.0
    %1489 = vmatpush1.msra.mxu0 0.0
    %1490 = vmatprep.subr.mxu0 0.0
    %1491 = vmatpush1.msra.mxu0 0.0
    %1492 = vmatprep.subr.mxu0 0.0
    %1493 = vmatpush1.msra.mxu0 0.0
    %1494 = vmatprep.subr.mxu0 0.0
    %1495 = vmatpush1.msra.mxu0 0.0
    %1496 = vmatprep.subr.mxu0 0.0
    %1497 = vmatpush1.msra.mxu0 0.0
    %1498 = vmatprep.subr.mxu0 0.0
    %1499 = vmatpush1.msra.mxu0 0.0
    %1500 = vmatprep.subr.mxu0 0.0
    %1501 = vmatpush1.msra.mxu0 0.0
    %1502 = vmatprep.subr.mxu0 0.0
    %1503 = vmatpush1.msra.mxu0 0.0
    %1504 = vmatprep.subr.mxu0 0.0
    %1505 = vmatpush1.msra.mxu0 0.0
    %1506 = vmatprep.subr.mxu0 0.0
    %1507 = vmatpush1.msra.mxu0 0.0
    %1508 = vmatprep.subr.mxu0 0.0
    %1509 = vmatpush1.msra.mxu0 0.0
    %1510 = vmatprep.subr.mxu0 0.0
    %1511 = vmatpush1.msra.mxu0 0.0
    %1512 = vmatprep.subr.mxu0 0.0
    %1513 = vmatpush1.msra.mxu0 0.0
    %1514 = vmatprep.subr.mxu0 0.0
    %1515 = vmatpush1.msra.mxu0 0.0
    %1516 = vmatprep.subr.mxu0 0.0
    %1517 = vmatpush1.msra.mxu0 0.0
    %1518 = vmatprep.subr.mxu0 0.0
    %1519 = vmatpush1.msra.mxu0 0.0
    %1520 = vmatprep.subr.mxu0 0.0
    %1521 = vmatpush1.msra.mxu0 0.0
    %1522 = vmatprep.subr.mxu0 0.0
    %1523 = vmatpush1.msra.mxu0 0.0
    %1524 = vmatprep.subr.mxu0 0.0
    %1525 = vmatpush1.msra.mxu0 0.0
    %1526 = vmatprep.subr.mxu0 0.0
    %1527 = vmatpush1.msra.mxu0 0.0
    %1528 = vmatprep.subr.mxu0 0.0
    %1529 = vmatpush1.msra.mxu0 0.0
    %1530 = vmatprep.subr.mxu0 0.0
    %1531 = vmatpush1.msra.mxu0 0.0
    %1532 = vmatprep.subr.mxu0 0.0
    %1533 = vmatpush1.msra.mxu0 0.0
    %1534 = vmatprep.mubr.f32.mxu0 0.0
    %1535 = vmatmul.mubr.f32.gmra.mrb[0].mxu0 %v384
    %v1536 = vpop.f32.mrb[0].mxu0
    %v1537 = vadd.f32 0.0, %v1536
    %v1538 = vpop.f32.mrb[0].mxu0
    %1539 = vmatprep.mubr.f32.mxu0 0.0
    %1540 = vmatmul.mubr.f32.gmra.mrb[0].mxu0 %v387
    %v1541 = vpop.f32.mrb[0].mxu0
    %v1542 = vadd.f32 0.0, %v1541
    %v1543 = vpop.f32.mrb[0].mxu0
    %1544 = vmatprep.mubr.f32.mxu0 0.0
    %1545 = vmatmul.mubr.f32.gmra.mrb[0].mxu0 %v390
    %v1546 = vpop.f32.mrb[0].mxu0
    %v1547 = vadd.f32 0.0, %v1546
    %v1548 = vpop.f32.mrb[0].mxu0
    %1549 = vmatprep.mubr.f32.mxu0 0.0
    %1550 = vmatmul.mubr.f32.gmra.mrb[0].mxu0 %v393
    %v1551 = vpop.f32.mrb[0].mxu0
    %v1552 = vadd.f32 0.0, %v1551
    %v1553 = vpop.f32.mrb[0].mxu0
    %1554 = vdwg.mxu0
    %1555 = vmatprep.subr.mxu0 0.0
    %1556 = vmatpush1.msra.mxu0 %v1178
    %1557 = vmatprep.subr.mxu0 0.0
    %1558 = vmatpush1.msra.mxu0 %v1179
    %1559 = vmatprep.subr.mxu0 0.0
    %1560 = vmatpush1.msra.mxu0 0.0
    %1561 = vmatprep.subr.mxu0 0.0
    %1562 = vmatpush1.msra.mxu0 0.0
    %1563 = vmatprep.subr.mxu0 0.0
    %1564 = vmatpush1.msra.mxu0 0.0
    %1565 = vmatprep.subr.mxu0 0.0
    %1566 = vmatpush1.msra.mxu0 0.0
    %1567 = vmatprep.subr.mxu0 0.0
    %1568 = vmatpush1.msra.mxu0 0.0
    %1569 = vmatprep.subr.mxu0 0.0
    %1570 = vmatpush1.msra.mxu0 0.0
    %1571 = vmatprep.subr.mxu0 0.0
    %1572 = vmatpush1.msra.mxu0 0.0
    %1573 = vmatprep.subr.mxu0 0.0
    %1574 = vmatpush1.msra.mxu0 0.0
    %1575 = vmatprep.subr.mxu0 0.0
    %1576 = vmatpush1.msra.mxu0 0.0
    %1577 = vmatprep.subr.mxu0 0.0
    %1578 = vmatpush1.msra.mxu0 0.0
    %1579 = vmatprep.subr.mxu0 0.0
    %1580 = vmatpush1.msra.mxu0 0.0
    %1581 = vmatprep.subr.mxu0 0.0
    %1582 = vmatpush1.msra.mxu0 0.0
    %1583 = vmatprep.subr.mxu0 0.0
    %1584 = vmatpush1.msra.mxu0 0.0
    %1585 = vmatprep.subr.mxu0 0.0
    %1586 = vmatpush1.msra.mxu0 0.0
    %1587 = vmatprep.subr.mxu0 0.0
    %1588 = vmatpush1.msra.mxu0 0.0
    %1589 = vmatprep.subr.mxu0 0.0
    %1590 = vmatpush1.msra.mxu0 0.0
    %1591 = vmatprep.subr.mxu0 0.0
    %1592 = vmatpush1.msra.mxu0 0.0
    %1593 = vmatprep.subr.mxu0 0.0
    %1594 = vmatpush1.msra.mxu0 0.0
    %1595 = vmatprep.subr.mxu0 0.0
    %1596 = vmatpush1.msra.mxu0 0.0
    %1597 = vmatprep.subr.mxu0 0.0
    %1598 = vmatpush1.msra.mxu0 0.0
    %1599 = vmatprep.subr.mxu0 0.0
    %1600 = vmatpush1.msra.mxu0 0.0
    %1601 = vmatprep.subr.mxu0 0.0
    %1602 = vmatpush1.msra.mxu0 0.0
    %1603 = vmatprep.subr.mxu0 0.0
    %1604 = vmatpush1.msra.mxu0 0.0
    %1605 = vmatprep.subr.mxu0 0.0
    %1606 = vmatpush1.msra.mxu0 0.0
    %1607 = vmatprep.subr.mxu0 0.0
    %1608 = vmatpush1.msra.mxu0 0.0
    %1609 = vmatprep.subr.mxu0 0.0
    %1610 = vmatpush1.msra.mxu0 0.0
    %1611 = vmatprep.subr.mxu0 0.0
    %1612 = vmatpush1.msra.mxu0 0.0
    %1613 = vmatprep.subr.mxu0 0.0
    %1614 = vmatpush1.msra.mxu0 0.0
    %1615 = vmatprep.subr.mxu0 0.0
    %1616 = vmatpush1.msra.mxu0 0.0
    %1617 = vmatprep.subr.mxu0 0.0
    %1618 = vmatpush1.msra.mxu0 0.0
    %1619 = vmatprep.mubr.f32.mxu0 0.0
    %1620 = vmatmul.mubr.f32.gmra.mrb[0].mxu0 %v481
    %v1621 = vpop.f32.mrb[0].mxu0
    %v1622 = vadd.f32 0.0, %v1621
    %v1623 = vpop.f32.mrb[0].mxu0
    %1624 = vmatprep.mubr.f32.mxu0 0.0
    %1625 = vmatmul.mubr.f32.gmra.mrb[0].mxu0 %v484
    %v1626 = vpop.f32.mrb[0].mxu0
    %v1627 = vadd.f32 0.0, %v1626
    %v1628 = vpop.f32.mrb[0].mxu0
    %1629 = vmatprep.mubr.f32.mxu0 0.0
    %1630 = vmatmul.mubr.f32.gmra.mrb[0].mxu0 %v487
    %v1631 = vpop.f32.mrb[0].mxu0
    %v1632 = vadd.f32 0.0, %v1631
    %v1633 = vpop.f32.mrb[0].mxu0
    %1634 = vmatprep.mubr.f32.mxu0 0.0
    %1635 = vmatmul.mubr.f32.gmra.mrb[0].mxu0 %v490
    %v1636 = vpop.f32.mrb[0].mxu0
    %v1637 = vadd.f32 0.0, %v1636
    %v1638 = vpop.f32.mrb[0].mxu0
    %1639 = vdwg.mxu0
    %v1641 = vsel %vm590, %v1469, 0
    %1643 = vmatprep.subr.mxu0 0.0
    %1644 = vmatpush1.msra.mxu0 %v1641
    %1645 = vmatprep.subr.mxu0 0.0
    %1646 = vmatpush1.msra.mxu0 0.0
    %1647 = vmatprep.subr.mxu0 0.0
    %1648 = vmatpush1.msra.mxu0 0.0
    %1649 = vmatprep.subr.mxu0 0.0
    %1650 = vmatpush1.msra.mxu0 0.0
    %1651 = vmatprep.subr.mxu0 0.0
    %1652 = vmatpush1.msra.mxu0 0.0
    %1653 = vmatprep.subr.mxu0 0.0
    %1654 = vmatpush1.msra.mxu0 0.0
    %1655 = vmatprep.subr.mxu0 0.0
    %1656 = vmatpush1.msra.mxu0 0.0
    %1657 = vmatprep.subr.mxu0 0.0
    %1658 = vmatpush1.msra.mxu0 0.0
    %1659 = vmatprep.subr.mxu0 0.0
    %1660 = vmatpush1.msra.mxu0 0.0
    %1661 = vmatprep.subr.mxu0 0.0
    %1662 = vmatpush1.msra.mxu0 0.0
    %1663 = vmatprep.subr.mxu0 0.0
    %1664 = vmatpush1.msra.mxu0 0.0
    %1665 = vmatprep.subr.mxu0 0.0
    %1666 = vmatpush1.msra.mxu0 0.0
    %1667 = vmatprep.subr.mxu0 0.0
    %1668 = vmatpush1.msra.mxu0 0.0
    %1669 = vmatprep.subr.mxu0 0.0
    %1670 = vmatpush1.msra.mxu0 0.0
    %1671 = vmatprep.subr.mxu0 0.0
    %1672 = vmatpush1.msra.mxu0 0.0
    %1673 = vmatprep.subr.mxu0 0.0
    %1674 = vmatpush1.msra.mxu0 0.0
    %1675 = vmatprep.subr.mxu0 0.0
    %1676 = vmatpush1.msra.mxu0 0.0
    %1677 = vmatprep.subr.mxu0 0.0
    %1678 = vmatpush1.msra.mxu0 0.0
    %1679 = vmatprep.subr.mxu0 0.0
    %1680 = vmatpush1.msra.mxu0 0.0
    %1681 = vmatprep.subr.mxu0 0.0
    %1682 = vmatpush1.msra.mxu0 0.0
    %1683 = vmatprep.subr.mxu0 0.0
    %1684 = vmatpush1.msra.mxu0 0.0
    %1685 = vmatprep.subr.mxu0 0.0
    %1686 = vmatpush1.msra.mxu0 0.0
    %1687 = vmatprep.subr.mxu0 0.0
    %1688 = vmatpush1.msra.mxu0 0.0
    %1689 = vmatprep.subr.mxu0 0.0
    %1690 = vmatpush1.msra.mxu0 0.0
    %1691 = vmatprep.subr.mxu0 0.0
    %1692 = vmatpush1.msra.mxu0 0.0
    %1693 = vmatprep.subr.mxu0 0.0
    %1694 = vmatpush1.msra.mxu0 0.0
    %1695 = vmatprep.subr.mxu0 0.0
    %1696 = vmatpush1.msra.mxu0 0.0
    %1697 = vmatprep.subr.mxu0 0.0
    %1698 = vmatpush1.msra.mxu0 0.0
    %1699 = vmatprep.subr.mxu0 0.0
    %1700 = vmatpush1.msra.mxu0 0.0
    %1701 = vmatprep.subr.mxu0 0.0
    %1702 = vmatpush1.msra.mxu0 0.0
    %1703 = vmatprep.subr.mxu0 0.0
    %1704 = vmatpush1.msra.mxu0 0.0
    %1705 = vmatprep.subr.mxu0 0.0
    %1706 = vmatpush1.msra.mxu0 0.0
    %1707 = vmatprep.mubr.f32.mxu0 0.0
    %1708 = vmatmul.mubr.f32.gmra.mrb[0].mxu0 %v579
    %v1709 = vpop.f32.mrb[0].mxu0
    %v1710 = vadd.f32 0.0, %v1709
    %v1711 = vpop.f32.mrb[0].mxu0
    %1712 = vmatprep.mubr.f32.mxu0 0.0
    %1713 = vmatmul.mubr.f32.gmra.mrb[0].mxu0 %v582
    %v1714 = vpop.f32.mrb[0].mxu0
    %v1715 = vadd.f32 0.0, %v1714
    %v1716 = vpop.f32.mrb[0].mxu0
    %1717 = vmatprep.mubr.f32.mxu0 0.0
    %1718 = vmatmul.mubr.f32.gmra.mrb[0].mxu0 %v585
    %v1719 = vpop.f32.mrb[0].mxu0
    %v1720 = vadd.f32 0.0, %v1719
    %v1721 = vpop.f32.mrb[0].mxu0
    %1722 = vmatprep.mubr.f32.mxu0 0.0
    %1723 = vmatmul.mubr.f32.gmra.mrb[0].mxu0 %v588
    %v1724 = vpop.f32.mrb[0].mxu0
    %v1725 = vadd.f32 0.0, %v1724
    %v1726 = vpop.f32.mrb[0].mxu0
    %1727 = vdwg.mxu0
    %1728 = vmatprep.subr.mxu0 0.0
    %1729 = vmatpush1.msra.mxu0 %v219
    %1730 = vmatprep.subr.mxu0 0.0
    %1731 = vmatpush1.msra.mxu0 %v220
    %1732 = vmatprep.subr.mxu0 0.0
    %1733 = vmatpush1.msra.mxu0 %v221
    %1734 = vmatprep.subr.mxu0 0.0
    %1735 = vmatpush1.msra.mxu0 %v222
    %1736 = vmatprep.subr.mxu0 0.0
    %1737 = vmatpush1.msra.mxu0 %v223
    %1738 = vmatprep.subr.mxu0 0.0
    %1739 = vmatpush1.msra.mxu0 %v224
    %1740 = vmatprep.subr.mxu0 0.0
    %1741 = vmatpush1.msra.mxu0 %v225
    %1742 = vmatprep.subr.mxu0 0.0
    %1743 = vmatpush1.msra.mxu0 %v226
    %1744 = vmatprep.subr.mxu0 0.0
    %1745 = vmatpush1.msra.mxu0 %v227
    %1746 = vmatprep.subr.mxu0 0.0
    %1747 = vmatpush1.msra.mxu0 %v228
    %1748 = vmatprep.subr.mxu0 0.0
    %1749 = vmatpush1.msra.mxu0 %v229
    %1750 = vmatprep.subr.mxu0 0.0
    %1751 = vmatpush1.msra.mxu0 %v230
    %1752 = vmatprep.subr.mxu0 0.0
    %1753 = vmatpush1.msra.mxu0 %v231
    %1754 = vmatprep.subr.mxu0 0.0
    %1755 = vmatpush1.msra.mxu0 %v232
    %1756 = vmatprep.subr.mxu0 0.0
    %1757 = vmatpush1.msra.mxu0 %v233
    %1758 = vmatprep.subr.mxu0 0.0
    %1759 = vmatpush1.msra.mxu0 %v234
    %1760 = vmatprep.subr.mxu0 0.0
    %1761 = vmatpush1.msra.mxu0 %v235
    %1762 = vmatprep.subr.mxu0 0.0
    %1763 = vmatpush1.msra.mxu0 %v236
    %1764 = vmatprep.subr.mxu0 0.0
    %1765 = vmatpush1.msra.mxu0 %v237
    %1766 = vmatprep.subr.mxu0 0.0
    %1767 = vmatpush1.msra.mxu0 %v238
    %1768 = vmatprep.subr.mxu0 0.0
    %1769 = vmatpush1.msra.mxu0 %v239
    %1770 = vmatprep.subr.mxu0 0.0
    %1771 = vmatpush1.msra.mxu0 %v240
    %1772 = vmatprep.subr.mxu0 0.0
    %1773 = vmatpush1.msra.mxu0 %v241
    %1774 = vmatprep.subr.mxu0 0.0
    %1775 = vmatpush1.msra.mxu0 %v242
    %1776 = vmatprep.subr.mxu0 0.0
    %1777 = vmatpush1.msra.mxu0 %v243
    %1778 = vmatprep.subr.mxu0 0.0
    %1779 = vmatpush1.msra.mxu0 %v244
    %1780 = vmatprep.subr.mxu0 0.0
    %1781 = vmatpush1.msra.mxu0 %v245
    %1782 = vmatprep.subr.mxu0 0.0
    %1783 = vmatpush1.msra.mxu0 %v246
    %1784 = vmatprep.subr.mxu0 0.0
    %1785 = vmatpush1.msra.mxu0 %v247
    %1786 = vmatprep.subr.mxu0 0.0
    %1787 = vmatpush1.msra.mxu0 %v248
    %1788 = vmatprep.subr.mxu0 0.0
    %1789 = vmatpush1.msra.mxu0 %v249
    %1790 = vmatprep.subr.mxu0 0.0
    %1791 = vmatpush1.msra.mxu0 %v250
    %1792 = vmatprep.mubr.f32.mxu0 %v1622
    %1793 = vmatmul.mubr.f32.gmra.mrb[0].mxu0 %v1537
    %v1794 = vpop.f32.mrb[0].mxu0
    %v1795 = vadd.f32 %v683, %v1794
    %v1796 = vpop.f32.mrb[0].mxu0
    %1797 = vmatprep.mubr.f32.mxu0 %v1627
    %1798 = vmatmul.mubr.f32.gmra.mrb[0].mxu0 %v1542
    %v1799 = vpop.f32.mrb[0].mxu0
    %v1800 = vadd.f32 %v683, %v1799
    %v1801 = vpop.f32.mrb[0].mxu0
    %1802 = vmatprep.mubr.f32.mxu0 %v1632
    %1803 = vmatmul.mubr.f32.gmra.mrb[0].mxu0 %v1547
    %v1804 = vpop.f32.mrb[0].mxu0
    %v1805 = vadd.f32 %v683, %v1804
    %v1806 = vpop.f32.mrb[0].mxu0
    %1807 = vmatprep.mubr.f32.mxu0 %v1637
    %1808 = vmatmul.mubr.f32.gmra.mrb[0].mxu0 %v1552
    %v1809 = vpop.f32.mrb[0].mxu0
    %v1810 = vadd.f32 %v683, %v1809
    %v1811 = vpop.f32.mrb[0].mxu0
    %1812 = vdwg.mxu0
    %1813 = vmatprep.subr.mxu0 0.0
    %1814 = vmatpush1.msra.mxu0 %v251
    %1815 = vmatprep.subr.mxu0 0.0
    %1816 = vmatpush1.msra.mxu0 %v252
    %1817 = vmatprep.subr.mxu0 0.0
    %1818 = vmatpush1.msra.mxu0 %v253
    %1819 = vmatprep.subr.mxu0 0.0
    %1820 = vmatpush1.msra.mxu0 %v254
    %1821 = vmatprep.subr.mxu0 0.0
    %1822 = vmatpush1.msra.mxu0 %v255
    %1823 = vmatprep.subr.mxu0 0.0
    %1824 = vmatpush1.msra.mxu0 %v256
    %1825 = vmatprep.subr.mxu0 0.0
    %1826 = vmatpush1.msra.mxu0 %v257
    %1827 = vmatprep.subr.mxu0 0.0
    %1828 = vmatpush1.msra.mxu0 %v258
    %1829 = vmatprep.subr.mxu0 0.0
    %1830 = vmatpush1.msra.mxu0 %v259
    %1831 = vmatprep.subr.mxu0 0.0
    %1832 = vmatpush1.msra.mxu0 %v260
    %1833 = vmatprep.subr.mxu0 0.0
    %1834 = vmatpush1.msra.mxu0 %v261
    %1835 = vmatprep.subr.mxu0 0.0
    %1836 = vmatpush1.msra.mxu0 %v262
    %1837 = vmatprep.subr.mxu0 0.0
    %1838 = vmatpush1.msra.mxu0 %v263
    %1839 = vmatprep.subr.mxu0 0.0
    %1840 = vmatpush1.msra.mxu0 %v264
    %1841 = vmatprep.subr.mxu0 0.0
    %1842 = vmatpush1.msra.mxu0 %v265
    %1843 = vmatprep.subr.mxu0 0.0
    %1844 = vmatpush1.msra.mxu0 %v266
    %1845 = vmatprep.subr.mxu0 0.0
    %1846 = vmatpush1.msra.mxu0 %v267
    %1847 = vmatprep.subr.mxu0 0.0
    %1848 = vmatpush1.msra.mxu0 %v268
    %1849 = vmatprep.subr.mxu0 0.0
    %1850 = vmatpush1.msra.mxu0 %v269
    %1851 = vmatprep.subr.mxu0 0.0
    %1852 = vmatpush1.msra.mxu0 %v270
    %1853 = vmatprep.subr.mxu0 0.0
    %1854 = vmatpush1.msra.mxu0 %v271
    %1855 = vmatprep.subr.mxu0 0.0
    %1856 = vmatpush1.msra.mxu0 %v272
    %1857 = vmatprep.subr.mxu0 0.0
    %1858 = vmatpush1.msra.mxu0 %v273
    %1859 = vmatprep.subr.mxu0 0.0
    %1860 = vmatpush1.msra.mxu0 %v274
    %1861 = vmatprep.subr.mxu0 0.0
    %1862 = vmatpush1.msra.mxu0 %v275
    %1863 = vmatprep.subr.mxu0 0.0
    %1864 = vmatpush1.msra.mxu0 %v276
    %1865 = vmatprep.subr.mxu0 0.0
    %1866 = vmatpush1.msra.mxu0 %v277
    %1867 = vmatprep.subr.mxu0 0.0
    %1868 = vmatpush1.msra.mxu0 %v278
    %1869 = vmatprep.subr.mxu0 0.0
    %1870 = vmatpush1.msra.mxu0 %v279
    %1871 = vmatprep.subr.mxu0 0.0
    %1872 = vmatpush1.msra.mxu0 %v280
    %1873 = vmatprep.subr.mxu0 0.0
    %1874 = vmatpush1.msra.mxu0 %v281
    %1875 = vmatprep.subr.mxu0 0.0
    %1876 = vmatpush1.msra.mxu0 %v282
    %1877 = vmatprep.mubr.f32.mxu0 %v1710
    %1878 = vmatmul.mubr.f32.gmra.mrb[0].mxu0 %v855
    %v1879 = vpop.f32.mrb[0].mxu0
    %v1880 = vadd.f32 %v1795, %v1879
    %v1881 = vpop.f32.mrb[0].mxu0
    %1882 = vmatprep.mubr.f32.mxu0 %v1715
    %1883 = vmatmul.mubr.f32.gmra.mrb[0].mxu0 %v856
    %v1884 = vpop.f32.mrb[0].mxu0
    %v1885 = vadd.f32 %v1800, %v1884
    %v1886 = vpop.f32.mrb[0].mxu0
    %1887 = vmatprep.mubr.f32.mxu0 %v1720
    %1888 = vmatmul.mubr.f32.gmra.mrb[0].mxu0 %v857
    %v1889 = vpop.f32.mrb[0].mxu0
    %v1890 = vadd.f32 %v1805, %v1889
    %v1891 = vpop.f32.mrb[0].mxu0
    %1892 = vmatprep.mubr.f32.mxu0 %v1725
    %1893 = vmatmul.mubr.f32.gmra.mrb[0].mxu0 %v858
    %v1894 = vpop.f32.mrb[0].mxu0
    %v1895 = vadd.f32 %v1810, %v1894
    %v1896 = vpop.f32.mrb[0].mxu0
    %1897 = vdwg.mxu0
    %v1898 = vmax.f32 %v1880, 0.0
    %v1899 = vmax.f32 %v1885, 0.0
    %v1900 = vmax.f32 %v1890, 0.0
    %v1901 = vmax.f32 %v1895, 0.0
    %1902 = vmatprep.subr.mxu0 0.0
    %1903 = vmatpush1.msra.mxu0 %v1898
    %1904 = vmatprep.subr.mxu0 0.0
    %1905 = vmatpush1.msra.mxu0 %v1899
    %1906 = vmatprep.subr.mxu0 0.0
    %1907 = vmatpush1.msra.mxu0 %v1900
    %1908 = vmatprep.subr.mxu0 0.0
    %1909 = vmatpush1.msra.mxu0 %v1901
    %1910 = vmatprep.subr.mxu0 0.0
    %1911 = vmatpush1.msra.mxu0 0.0
    %1912 = vmatprep.subr.mxu0 0.0
    %1913 = vmatpush1.msra.mxu0 0.0
    %1914 = vmatprep.subr.mxu0 0.0
    %1915 = vmatpush1.msra.mxu0 0.0
    %1916 = vmatprep.subr.mxu0 0.0
    %1917 = vmatpush1.msra.mxu0 0.0
    %1918 = vmatprep.subr.mxu0 0.0
    %1919 = vmatpush1.msra.mxu0 0.0
    %1920 = vmatprep.subr.mxu0 0.0
    %1921 = vmatpush1.msra.mxu0 0.0
    %1922 = vmatprep.subr.mxu0 0.0
    %1923 = vmatpush1.msra.mxu0 0.0
    %1924 = vmatprep.subr.mxu0 0.0
    %1925 = vmatpush1.msra.mxu0 0.0
    %1926 = vmatprep.subr.mxu0 0.0
    %1927 = vmatpush1.msra.mxu0 0.0
    %1928 = vmatprep.subr.mxu0 0.0
    %1929 = vmatpush1.msra.mxu0 0.0
    %1930 = vmatprep.subr.mxu0 0.0
    %1931 = vmatpush1.msra.mxu0 0.0
    %1932 = vmatprep.subr.mxu0 0.0
    %1933 = vmatpush1.msra.mxu0 0.0
    %1934 = vmatprep.subr.mxu0 0.0
    %1935 = vmatpush1.msra.mxu0 0.0
    %1936 = vmatprep.subr.mxu0 0.0
    %1937 = vmatpush1.msra.mxu0 0.0
    %1938 = vmatprep.subr.mxu0 0.0
    %1939 = vmatpush1.msra.mxu0 0.0
    %1940 = vmatprep.subr.mxu0 0.0
    %1941 = vmatpush1.msra.mxu0 0.0
    %1942 = vmatprep.subr.mxu0 0.0
    %1943 = vmatpush1.msra.mxu0 0.0
    %1944 = vmatprep.subr.mxu0 0.0
    %1945 = vmatpush1.msra.mxu0 0.0
    %1946 = vmatprep.subr.mxu0 0.0
    %1947 = vmatpush1.msra.mxu0 0.0
    %1948 = vmatprep.subr.mxu0 0.0
    %1949 = vmatpush1.msra.mxu0 0.0
    %1950 = vmatprep.subr.mxu0 0.0
    %1951 = vmatpush1.msra.mxu0 0.0
    %1952 = vmatprep.subr.mxu0 0.0
    %1953 = vmatpush1.msra.mxu0 0.0
    %1954 = vmatprep.subr.mxu0 0.0
    %1955 = vmatpush1.msra.mxu0 0.0
    %1956 = vmatprep.subr.mxu0 0.0
    %1957 = vmatpush1.msra.mxu0 0.0
    %1958 = vmatprep.subr.mxu0 0.0
    %1959 = vmatpush1.msra.mxu0 0.0
    %1960 = vmatprep.subr.mxu0 0.0
    %1961 = vmatpush1.msra.mxu0 0.0
    %1962 = vmatprep.subr.mxu0 0.0
    %1963 = vmatpush1.msra.mxu0 0.0
    %1964 = vmatprep.subr.mxu0 0.0
    %1965 = vmatpush1.msra.mxu0 0.0
    %1966 = vmatprep.mubr.f32.mxu0 0.0
    %1967 = vmatmul.mubr.f32.gmra.mrb[0].mxu0 %v861
    %v1968 = vpop.f32.mrb[0].mxu0
    %v1969 = vadd.f32 0.0, %v1968
    %v1970 = vpop.f32.mrb[0].mxu0
    %1971 = vmatprep.mubr.f32.mxu0 0.0
    %1972 = vmatmul.mubr.f32.gmra.mrb[0].mxu0 %v864
    %v1973 = vpop.f32.mrb[0].mxu0
    %v1974 = vadd.f32 0.0, %v1973
    %v1975 = vpop.f32.mrb[0].mxu0
    %1976 = vdwg.mxu0
    %1977 = vmatprep.subr.mxu0 0.0
    %1978 = vmatpush1.msra.mxu0 %v1641
    %1979 = vmatprep.subr.mxu0 0.0
    %1980 = vmatpush1.msra.mxu0 0.0
    %1981 = vmatprep.subr.mxu0 0.0
    %1982 = vmatpush1.msra.mxu0 0.0
    %1983 = vmatprep.subr.mxu0 0.0
    %1984 = vmatpush1.msra.mxu0 0.0
    %1985 = vmatprep.subr.mxu0 0.0
    %1986 = vmatpush1.msra.mxu0 0.0
    %1987 = vmatprep.subr.mxu0 0.0
    %1988 = vmatpush1.msra.mxu0 0.0
    %1989 = vmatprep.subr.mxu0 0.0
    %1990 = vmatpush1.msra.mxu0 0.0
    %1991 = vmatprep.subr.mxu0 0.0
    %1992 = vmatpush1.msra.mxu0 0.0
    %1993 = vmatprep.subr.mxu0 0.0
    %1994 = vmatpush1.msra.mxu0 0.0
    %1995 = vmatprep.subr.mxu0 0.0
    %1996 = vmatpush1.msra.mxu0 0.0
    %1997 = vmatprep.subr.mxu0 0.0
    %1998 = vmatpush1.msra.mxu0 0.0
    %1999 = vmatprep.subr.mxu0 0.0
    %2000 = vmatpush1.msra.mxu0 0.0
    %2001 = vmatprep.subr.mxu0 0.0
    %2002 = vmatpush1.msra.mxu0 0.0
    %2003 = vmatprep.subr.mxu0 0.0
    %2004 = vmatpush1.msra.mxu0 0.0
    %2005 = vmatprep.subr.mxu0 0.0
    %2006 = vmatpush1.msra.mxu0 0.0
    %2007 = vmatprep.subr.mxu0 0.0
    %2008 = vmatpush1.msra.mxu0 0.0
    %2009 = vmatprep.subr.mxu0 0.0
    %2010 = vmatpush1.msra.mxu0 0.0
    %2011 = vmatprep.subr.mxu0 0.0
    %2012 = vmatpush1.msra.mxu0 0.0
    %2013 = vmatprep.subr.mxu0 0.0
    %2014 = vmatpush1.msra.mxu0 0.0
    %2015 = vmatprep.subr.mxu0 0.0
    %2016 = vmatpush1.msra.mxu0 0.0
    %2017 = vmatprep.subr.mxu0 0.0
    %2018 = vmatpush1.msra.mxu0 0.0
    %2019 = vmatprep.subr.mxu0 0.0
    %2020 = vmatpush1.msra.mxu0 0.0
    %2021 = vmatprep.subr.mxu0 0.0
    %2022 = vmatpush1.msra.mxu0 0.0
    %2023 = vmatprep.subr.mxu0 0.0
    %2024 = vmatpush1.msra.mxu0 0.0
    %2025 = vmatprep.subr.mxu0 0.0
    %2026 = vmatpush1.msra.mxu0 0.0
    %2027 = vmatprep.subr.mxu0 0.0
    %2028 = vmatpush1.msra.mxu0 0.0
    %2029 = vmatprep.subr.mxu0 0.0
    %2030 = vmatpush1.msra.mxu0 0.0
    %2031 = vmatprep.subr.mxu0 0.0
    %2032 = vmatpush1.msra.mxu0 0.0
    %2033 = vmatprep.subr.mxu0 0.0
    %2034 = vmatpush1.msra.mxu0 0.0
    %2035 = vmatprep.subr.mxu0 0.0
    %2036 = vmatpush1.msra.mxu0 0.0
    %2037 = vmatprep.subr.mxu0 0.0
    %2038 = vmatpush1.msra.mxu0 0.0
    %2039 = vmatprep.subr.mxu0 0.0
    %2040 = vmatpush1.msra.mxu0 0.0
    %2041 = vmatprep.mubr.f32.mxu0 0.0
    %2042 = vmatmul.mubr.f32.gmra.mrb[0].mxu0 %v942
    %v2043 = vpop.f32.mrb[0].mxu0
    %v2044 = vadd.f32 0.0, %v2043
    %v2045 = vpop.f32.mrb[0].mxu0
    %2046 = vmatprep.mubr.f32.mxu0 0.0
    %2047 = vmatmul.mubr.f32.gmra.mrb[0].mxu0 %v945
    %v2048 = vpop.f32.mrb[0].mxu0
    %v2049 = vadd.f32 0.0, %v2048
    %v2050 = vpop.f32.mrb[0].mxu0
    %2051 = vdwg.mxu0
    %2052 = vmatprep.subr.mxu0 0.0
    %2053 = vmatpush1.msra.mxu0 %v284
    %2054 = vmatprep.subr.mxu0 0.0
    %2055 = vmatpush1.msra.mxu0 %v285
    %2056 = vmatprep.subr.mxu0 0.0
    %2057 = vmatpush1.msra.mxu0 %v286
    %2058 = vmatprep.subr.mxu0 0.0
    %2059 = vmatpush1.msra.mxu0 %v287
    %2060 = vmatprep.subr.mxu0 0.0
    %2061 = vmatpush1.msra.mxu0 %v288
    %2062 = vmatprep.subr.mxu0 0.0
    %2063 = vmatpush1.msra.mxu0 %v289
    %2064 = vmatprep.subr.mxu0 0.0
    %2065 = vmatpush1.msra.mxu0 %v290
    %2066 = vmatprep.subr.mxu0 0.0
    %2067 = vmatpush1.msra.mxu0 %v291
    %2068 = vmatprep.subr.mxu0 0.0
    %2069 = vmatpush1.msra.mxu0 %v292
    %2070 = vmatprep.subr.mxu0 0.0
    %2071 = vmatpush1.msra.mxu0 %v293
    %2072 = vmatprep.subr.mxu0 0.0
    %2073 = vmatpush1.msra.mxu0 %v294
    %2074 = vmatprep.subr.mxu0 0.0
    %2075 = vmatpush1.msra.mxu0 %v295
    %2076 = vmatprep.subr.mxu0 0.0
    %2077 = vmatpush1.msra.mxu0 %v296
    %2078 = vmatprep.subr.mxu0 0.0
    %2079 = vmatpush1.msra.mxu0 %v297
    %2080 = vmatprep.subr.mxu0 0.0
    %2081 = vmatpush1.msra.mxu0 %v298
    %2082 = vmatprep.subr.mxu0 0.0
    %2083 = vmatpush1.msra.mxu0 %v299
    %2084 = vmatprep.subr.mxu0 0.0
    %2085 = vmatpush1.msra.mxu0 %v300
    %2086 = vmatprep.subr.mxu0 0.0
    %2087 = vmatpush1.msra.mxu0 %v301
    %2088 = vmatprep.subr.mxu0 0.0
    %2089 = vmatpush1.msra.mxu0 %v302
    %2090 = vmatprep.subr.mxu0 0.0
    %2091 = vmatpush1.msra.mxu0 %v303
    %2092 = vmatprep.subr.mxu0 0.0
    %2093 = vmatpush1.msra.mxu0 %v304
    %2094 = vmatprep.subr.mxu0 0.0
    %2095 = vmatpush1.msra.mxu0 %v305
    %2096 = vmatprep.subr.mxu0 0.0
    %2097 = vmatpush1.msra.mxu0 %v306
    %2098 = vmatprep.subr.mxu0 0.0
    %2099 = vmatpush1.msra.mxu0 %v307
    %2100 = vmatprep.subr.mxu0 0.0
    %2101 = vmatpush1.msra.mxu0 %v308
    %2102 = vmatprep.subr.mxu0 0.0
    %2103 = vmatpush1.msra.mxu0 %v309
    %2104 = vmatprep.subr.mxu0 0.0
    %2105 = vmatpush1.msra.mxu0 %v310
    %2106 = vmatprep.subr.mxu0 0.0
    %2107 = vmatpush1.msra.mxu0 %v311
    %2108 = vmatprep.subr.mxu0 0.0
    %2109 = vmatpush1.msra.mxu0 %v312
    %2110 = vmatprep.subr.mxu0 0.0
    %2111 = vmatpush1.msra.mxu0 %v313
    %2112 = vmatprep.subr.mxu0 0.0
    %2113 = vmatpush1.msra.mxu0 %v314
    %2114 = vmatprep.subr.mxu0 0.0
    %2115 = vmatpush1.msra.mxu0 %v315
    %2116 = vmatprep.mubr.f32.mxu0 %v1969
    %2117 = vmatmul.mubr.f32.gmra.mrb[0].mxu0 %v1178
    %v2118 = vpop.f32.mrb[0].mxu0
    %v2119 = vadd.f32 %v1026, %v2118
    %v2120 = vpop.f32.mrb[0].mxu0
    %2121 = vmatprep.mubr.f32.mxu0 %v1974
    %2122 = vmatmul.mubr.f32.gmra.mrb[0].mxu0 %v1179
    %v2123 = vpop.f32.mrb[0].mxu0
    %v2124 = vadd.f32 %v1026, %v2123
    %v2125 = vpop.f32.mrb[0].mxu0
    %2126 = vdwg.mxu0
    %2127 = vmatprep.subr.mxu0 0.0
    %2128 = vmatpush1.msra.mxu0 %v316
    %2129 = vmatprep.subr.mxu0 0.0
    %2130 = vmatpush1.msra.mxu0 %v317
    %2131 = vmatprep.subr.mxu0 0.0
    %2132 = vmatpush1.msra.mxu0 %v318
    %2133 = vmatprep.subr.mxu0 0.0
    %2134 = vmatpush1.msra.mxu0 %v319
    %2135 = vmatprep.subr.mxu0 0.0
    %2136 = vmatpush1.msra.mxu0 %v320
    %2137 = vmatprep.subr.mxu0 0.0
    %2138 = vmatpush1.msra.mxu0 %v321
    %2139 = vmatprep.subr.mxu0 0.0
    %2140 = vmatpush1.msra.mxu0 %v322
    %2141 = vmatprep.subr.mxu0 0.0
    %2142 = vmatpush1.msra.mxu0 %v323
    %2143 = vmatprep.subr.mxu0 0.0
    %2144 = vmatpush1.msra.mxu0 %v324
    %2145 = vmatprep.subr.mxu0 0.0
    %2146 = vmatpush1.msra.mxu0 %v325
    %2147 = vmatprep.subr.mxu0 0.0
    %2148 = vmatpush1.msra.mxu0 %v326
    %2149 = vmatprep.subr.mxu0 0.0
    %2150 = vmatpush1.msra.mxu0 %v327
    %2151 = vmatprep.subr.mxu0 0.0
    %2152 = vmatpush1.msra.mxu0 %v328
    %2153 = vmatprep.subr.mxu0 0.0
    %2154 = vmatpush1.msra.mxu0 %v329
    %2155 = vmatprep.subr.mxu0 0.0
    %2156 = vmatpush1.msra.mxu0 %v330
    %2157 = vmatprep.subr.mxu0 0.0
    %2158 = vmatpush1.msra.mxu0 %v331
    %2159 = vmatprep.subr.mxu0 0.0
    %2160 = vmatpush1.msra.mxu0 0.0
    %2161 = vmatprep.subr.mxu0 0.0
    %2162 = vmatpush1.msra.mxu0 0.0
    %2163 = vmatprep.subr.mxu0 0.0
    %2164 = vmatpush1.msra.mxu0 0.0
    %2165 = vmatprep.subr.mxu0 0.0
    %2166 = vmatpush1.msra.mxu0 0.0
    %2167 = vmatprep.subr.mxu0 0.0
    %2168 = vmatpush1.msra.mxu0 0.0
    %2169 = vmatprep.subr.mxu0 0.0
    %2170 = vmatpush1.msra.mxu0 0.0
    %2171 = vmatprep.subr.mxu0 0.0
    %2172 = vmatpush1.msra.mxu0 0.0
    %2173 = vmatprep.subr.mxu0 0.0
    %2174 = vmatpush1.msra.mxu0 0.0
    %2175 = vmatprep.subr.mxu0 0.0
    %2176 = vmatpush1.msra.mxu0 0.0
    %2177 = vmatprep.subr.mxu0 0.0
    %2178 = vmatpush1.msra.mxu0 0.0
    %2179 = vmatprep.subr.mxu0 0.0
    %2180 = vmatpush1.msra.mxu0 0.0
    %2181 = vmatprep.subr.mxu0 0.0
    %2182 = vmatpush1.msra.mxu0 0.0
    %2183 = vmatprep.subr.mxu0 0.0
    %2184 = vmatpush1.msra.mxu0 0.0
    %2185 = vmatprep.subr.mxu0 0.0
    %2186 = vmatpush1.msra.mxu0 0.0
    %2187 = vmatprep.subr.mxu0 0.0
    %2188 = vmatpush1.msra.mxu0 0.0
    %2189 = vmatprep.subr.mxu0 0.0
    %2190 = vmatpush1.msra.mxu0 0.0
    %2191 = vmatprep.mubr.f32.mxu0 0.0
    %2192 = vmatmul.mubr.f32.gmra.mrb[0].mxu0 %v2044
    %v2193 = vpop.f32.mrb[0].mxu0
    %v2194 = vadd.f32 %v2119, %v2193
    %v2195 = vpop.f32.mrb[0].mxu0
    %2196 = vmatprep.mubr.f32.mxu0 0.0
    %2197 = vmatmul.mubr.f32.gmra.mrb[0].mxu0 %v2049
    %v2198 = vpop.f32.mrb[0].mxu0
    %v2199 = vadd.f32 %v2124, %v2198
    %v2200 = vpop.f32.mrb[0].mxu0
    %2201 = vdwg.mxu0
    %v2202 = vmax.f32 %v2194, 0.0
    %v2203 = vmax.f32 %v2199, 0.0
    %2204 = vmatprep.subr.mxu0 0.0
    %2205 = vmatpush1.msra.mxu0 %v2202
    %2206 = vmatprep.subr.mxu0 0.0
    %2207 = vmatpush1.msra.mxu0 %v2203
    %2208 = vmatprep.subr.mxu0 0.0
    %2209 = vmatpush1.msra.mxu0 0.0
    %2210 = vmatprep.subr.mxu0 0.0
    %2211 = vmatpush1.msra.mxu0 0.0
    %2212 = vmatprep.subr.mxu0 0.0
    %2213 = vmatpush1.msra.mxu0 0.0
    %2214 = vmatprep.subr.mxu0 0.0
    %2215 = vmatpush1.msra.mxu0 0.0
    %2216 = vmatprep.subr.mxu0 0.0
    %2217 = vmatpush1.msra.mxu0 0.0
    %2218 = vmatprep.subr.mxu0 0.0
    %2219 = vmatpush1.msra.mxu0 0.0
    %2220 = vmatprep.subr.mxu0 0.0
    %2221 = vmatpush1.msra.mxu0 0.0
    %2222 = vmatprep.subr.mxu0 0.0
    %2223 = vmatpush1.msra.mxu0 0.0
    %2224 = vmatprep.subr.mxu0 0.0
    %2225 = vmatpush1.msra.mxu0 0.0
    %2226 = vmatprep.subr.mxu0 0.0
    %2227 = vmatpush1.msra.mxu0 0.0
    %2228 = vmatprep.subr.mxu0 0.0
    %2229 = vmatpush1.msra.mxu0 0.0
    %2230 = vmatprep.subr.mxu0 0.0
    %2231 = vmatpush1.msra.mxu0 0.0
    %2232 = vmatprep.subr.mxu0 0.0
    %2233 = vmatpush1.msra.mxu0 0.0
    %2234 = vmatprep.subr.mxu0 0.0
    %2235 = vmatpush1.msra.mxu0 0.0
    %2236 = vmatprep.subr.mxu0 0.0
    %2237 = vmatpush1.msra.mxu0 0.0
    %2238 = vmatprep.subr.mxu0 0.0
    %2239 = vmatpush1.msra.mxu0 0.0
    %2240 = vmatprep.subr.mxu0 0.0
    %2241 = vmatpush1.msra.mxu0 0.0
    %2242 = vmatprep.subr.mxu0 0.0
    %2243 = vmatpush1.msra.mxu0 0.0
    %2244 = vmatprep.subr.mxu0 0.0
    %2245 = vmatpush1.msra.mxu0 0.0
    %2246 = vmatprep.subr.mxu0 0.0
    %2247 = vmatpush1.msra.mxu0 0.0
    %2248 = vmatprep.subr.mxu0 0.0
    %2249 = vmatpush1.msra.mxu0 0.0
    %2250 = vmatprep.subr.mxu0 0.0
    %2251 = vmatpush1.msra.mxu0 0.0
    %2252 = vmatprep.subr.mxu0 0.0
    %2253 = vmatpush1.msra.mxu0 0.0
    %2254 = vmatprep.subr.mxu0 0.0
    %2255 = vmatpush1.msra.mxu0 0.0
    %2256 = vmatprep.subr.mxu0 0.0
    %2257 = vmatpush1.msra.mxu0 0.0
    %2258 = vmatprep.subr.mxu0 0.0
    %2259 = vmatpush1.msra.mxu0 0.0
    %2260 = vmatprep.subr.mxu0 0.0
    %2261 = vmatpush1.msra.mxu0 0.0
    %2262 = vmatprep.subr.mxu0 0.0
    %2263 = vmatpush1.msra.mxu0 0.0
    %2264 = vmatprep.subr.mxu0 0.0
    %2265 = vmatpush1.msra.mxu0 0.0
    %2266 = vmatprep.subr.mxu0 0.0
    %2267 = vmatpush1.msra.mxu0 0.0
    %2268 = vmatprep.mubr.f32.mxu0 0.0
    %2269 = vmatmul.mubr.f32.gmra.mrb[0].mxu0 %v1181
    %v2270 = vpop.f32.mrb[0].mxu0
    %v2271 = vadd.f32 0.0, %v2270
    %v2272 = vpop.f32.mrb[0].mxu0
    %2273 = vdwg.mxu0
    %2274 = vmatprep.subr.mxu0 0.0
    %2275 = vmatpush1.msra.mxu0 %v1969
    %2276 = vmatprep.subr.mxu0 0.0
    %2277 = vmatpush1.msra.mxu0 %v1974
    %2278 = vmatprep.subr.mxu0 0.0
    %2279 = vmatpush1.msra.mxu0 0.0
    %2280 = vmatprep.subr.mxu0 0.0
    %2281 = vmatpush1.msra.mxu0 0.0
    %2282 = vmatprep.subr.mxu0 0.0
    %2283 = vmatpush1.msra.mxu0 0.0
    %2284 = vmatprep.subr.mxu0 0.0
    %2285 = vmatpush1.msra.mxu0 0.0
    %2286 = vmatprep.subr.mxu0 0.0
    %2287 = vmatpush1.msra.mxu0 0.0
    %2288 = vmatprep.subr.mxu0 0.0
    %2289 = vmatpush1.msra.mxu0 0.0
    %2290 = vmatprep.subr.mxu0 0.0
    %2291 = vmatpush1.msra.mxu0 0.0
    %2292 = vmatprep.subr.mxu0 0.0
    %2293 = vmatpush1.msra.mxu0 0.0
    %2294 = vmatprep.subr.mxu0 0.0
    %2295 = vmatpush1.msra.mxu0 0.0
    %2296 = vmatprep.subr.mxu0 0.0
    %2297 = vmatpush1.msra.mxu0 0.0
    %2298 = vmatprep.subr.mxu0 0.0
    %2299 = vmatpush1.msra.mxu0 0.0
    %2300 = vmatprep.subr.mxu0 0.0
    %2301 = vmatpush1.msra.mxu0 0.0
    %2302 = vmatprep.subr.mxu0 0.0
    %2303 = vmatpush1.msra.mxu0 0.0
    %2304 = vmatprep.subr.mxu0 0.0
    %2305 = vmatpush1.msra.mxu0 0.0
    %2306 = vmatprep.subr.mxu0 0.0
    %2307 = vmatpush1.msra.mxu0 0.0
    %2308 = vmatprep.subr.mxu0 0.0
    %2309 = vmatpush1.msra.mxu0 0.0
    %2310 = vmatprep.subr.mxu0 0.0
    %2311 = vmatpush1.msra.mxu0 0.0
    %2312 = vmatprep.subr.mxu0 0.0
    %2313 = vmatpush1.msra.mxu0 0.0
    %2314 = vmatprep.subr.mxu0 0.0
    %2315 = vmatpush1.msra.mxu0 0.0
    %2316 = vmatprep.subr.mxu0 0.0
    %2317 = vmatpush1.msra.mxu0 0.0
    %2318 = vmatprep.subr.mxu0 0.0
    %2319 = vmatpush1.msra.mxu0 0.0
    %2320 = vmatprep.subr.mxu0 0.0
    %2321 = vmatpush1.msra.mxu0 0.0
    %2322 = vmatprep.subr.mxu0 0.0
    %2323 = vmatpush1.msra.mxu0 0.0
    %2324 = vmatprep.subr.mxu0 0.0
    %2325 = vmatpush1.msra.mxu0 0.0
    %2326 = vmatprep.subr.mxu0 0.0
    %2327 = vmatpush1.msra.mxu0 0.0
    %2328 = vmatprep.subr.mxu0 0.0
    %2329 = vmatpush1.msra.mxu0 0.0
    %2330 = vmatprep.subr.mxu0 0.0
    %2331 = vmatpush1.msra.mxu0 0.0
    %2332 = vmatprep.subr.mxu0 0.0
    %2333 = vmatpush1.msra.mxu0 0.0
    %2334 = vmatprep.subr.mxu0 0.0
    %2335 = vmatpush1.msra.mxu0 0.0
    %2336 = vmatprep.subr.mxu0 0.0
    %2337 = vmatpush1.msra.mxu0 0.0
    %2338 = vmatprep.mubr.f32.mxu0 0.0
    %2339 = vmatmul.mubr.f32.gmra.mrb[0].mxu0 %v1181
    %v2340 = vpop.f32.mrb[0].mxu0
    %v2341 = vadd.f32 0.0, %v2340
    %v2342 = vpop.f32.mrb[0].mxu0
    %2343 = vdwg.mxu0
    %2344 = vmatprep.subr.mxu0 0.0
    %2345 = vmatpush1.msra.mxu0 %v333
    %2346 = vmatprep.subr.mxu0 0.0
    %2347 = vmatpush1.msra.mxu0 %v334
    %2348 = vmatprep.subr.mxu0 0.0
    %2349 = vmatpush1.msra.mxu0 %v335
    %2350 = vmatprep.subr.mxu0 0.0
    %2351 = vmatpush1.msra.mxu0 %v336
    %2352 = vmatprep.subr.mxu0 0.0
    %2353 = vmatpush1.msra.mxu0 %v337
    %2354 = vmatprep.subr.mxu0 0.0
    %2355 = vmatpush1.msra.mxu0 %v338
    %2356 = vmatprep.subr.mxu0 0.0
    %2357 = vmatpush1.msra.mxu0 %v339
    %2358 = vmatprep.subr.mxu0 0.0
    %2359 = vmatpush1.msra.mxu0 %v340
    %2360 = vmatprep.subr.mxu0 0.0
    %2361 = vmatpush1.msra.mxu0 %v341
    %2362 = vmatprep.subr.mxu0 0.0
    %2363 = vmatpush1.msra.mxu0 %v342
    %2364 = vmatprep.subr.mxu0 0.0
    %2365 = vmatpush1.msra.mxu0 %v343
    %2366 = vmatprep.subr.mxu0 0.0
    %2367 = vmatpush1.msra.mxu0 %v344
    %2368 = vmatprep.subr.mxu0 0.0
    %2369 = vmatpush1.msra.mxu0 %v345
    %2370 = vmatprep.subr.mxu0 0.0
    %2371 = vmatpush1.msra.mxu0 %v346
    %2372 = vmatprep.subr.mxu0 0.0
    %2373 = vmatpush1.msra.mxu0 %v347
    %2374 = vmatprep.subr.mxu0 0.0
    %2375 = vmatpush1.msra.mxu0 %v348
    %2376 = vmatprep.subr.mxu0 0.0
    %2377 = vmatpush1.msra.mxu0 %v349
    %2378 = vmatprep.subr.mxu0 0.0
    %2379 = vmatpush1.msra.mxu0 %v350
    %2380 = vmatprep.subr.mxu0 0.0
    %2381 = vmatpush1.msra.mxu0 %v351
    %2382 = vmatprep.subr.mxu0 0.0
    %2383 = vmatpush1.msra.mxu0 %v352
    %2384 = vmatprep.subr.mxu0 0.0
    %2385 = vmatpush1.msra.mxu0 %v353
    %2386 = vmatprep.subr.mxu0 0.0
    %2387 = vmatpush1.msra.mxu0 %v354
    %2388 = vmatprep.subr.mxu0 0.0
    %2389 = vmatpush1.msra.mxu0 %v355
    %2390 = vmatprep.subr.mxu0 0.0
    %2391 = vmatpush1.msra.mxu0 %v356
    %2392 = vmatprep.subr.mxu0 0.0
    %2393 = vmatpush1.msra.mxu0 %v357
    %2394 = vmatprep.subr.mxu0 0.0
    %2395 = vmatpush1.msra.mxu0 %v358
    %2396 = vmatprep.subr.mxu0 0.0
    %2397 = vmatpush1.msra.mxu0 %v359
    %2398 = vmatprep.subr.mxu0 0.0
    %2399 = vmatpush1.msra.mxu0 %v360
    %2400 = vmatprep.subr.mxu0 0.0
    %2401 = vmatpush1.msra.mxu0 %v361
    %2402 = vmatprep.subr.mxu0 0.0
    %2403 = vmatpush1.msra.mxu0 %v362
    %2404 = vmatprep.subr.mxu0 0.0
    %2405 = vmatpush1.msra.mxu0 %v363
    %2406 = vmatprep.subr.mxu0 0.0
    %2407 = vmatpush1.msra.mxu0 %v364
    %2408 = vmatprep.mubr.f32.mxu0 %v2341
    %2409 = vmatmul.mubr.f32.gmra.mrb[0].mxu0 %v2271
    %v2410 = vpop.f32.mrb[0].mxu0
    %v2411 = vadd.f32 %v1327, %v2410
    %v2412 = vpop.f32.mrb[0].mxu0
    %2413 = vdwg.mxu0
    %2414 = vmatprep.subr.mxu0 0.0
    %2415 = vmatpush1.msra.mxu0 %v365
    %2416 = vmatprep.subr.mxu0 0.0
    %2417 = vmatpush1.msra.mxu0 %v366
    %2418 = vmatprep.subr.mxu0 0.0
    %2419 = vmatpush1.msra.mxu0 %v367
    %2420 = vmatprep.subr.mxu0 0.0
    %2421 = vmatpush1.msra.mxu0 %v368
    %2422 = vmatprep.subr.mxu0 0.0
    %2423 = vmatpush1.msra.mxu0 %v369
    %2424 = vmatprep.subr.mxu0 0.0
    %2425 = vmatpush1.msra.mxu0 %v370
    %2426 = vmatprep.subr.mxu0 0.0
    %2427 = vmatpush1.msra.mxu0 %v371
    %2428 = vmatprep.subr.mxu0 0.0
    %2429 = vmatpush1.msra.mxu0 %v372
    %2430 = vmatprep.subr.mxu0 0.0
    %2431 = vmatpush1.msra.mxu0 %v373
    %2432 = vmatprep.subr.mxu0 0.0
    %2433 = vmatpush1.msra.mxu0 %v374
    %2434 = vmatprep.subr.mxu0 0.0
    %2435 = vmatpush1.msra.mxu0 %v375
    %2436 = vmatprep.subr.mxu0 0.0
    %2437 = vmatpush1.msra.mxu0 %v376
    %2438 = vmatprep.subr.mxu0 0.0
    %2439 = vmatpush1.msra.mxu0 %v377
    %2440 = vmatprep.subr.mxu0 0.0
    %2441 = vmatpush1.msra.mxu0 %v378
    %2442 = vmatprep.subr.mxu0 0.0
    %2443 = vmatpush1.msra.mxu0 %v379
    %2444 = vmatprep.subr.mxu0 0.0
    %2445 = vmatpush1.msra.mxu0 %v380
    %2446 = vmatprep.subr.mxu0 0.0
    %2447 = vmatpush1.msra.mxu0 0.0
    %2448 = vmatprep.subr.mxu0 0.0
    %2449 = vmatpush1.msra.mxu0 0.0
    %2450 = vmatprep.subr.mxu0 0.0
    %2451 = vmatpush1.msra.mxu0 0.0
    %2452 = vmatprep.subr.mxu0 0.0
    %2453 = vmatpush1.msra.mxu0 0.0
    %2454 = vmatprep.subr.mxu0 0.0
    %2455 = vmatpush1.msra.mxu0 0.0
    %2456 = vmatprep.subr.mxu0 0.0
    %2457 = vmatpush1.msra.mxu0 0.0
    %2458 = vmatprep.subr.mxu0 0.0
    %2459 = vmatpush1.msra.mxu0 0.0
    %2460 = vmatprep.subr.mxu0 0.0
    %2461 = vmatpush1.msra.mxu0 0.0
    %2462 = vmatprep.subr.mxu0 0.0
    %2463 = vmatpush1.msra.mxu0 0.0
    %2464 = vmatprep.subr.mxu0 0.0
    %2465 = vmatpush1.msra.mxu0 0.0
    %2466 = vmatprep.subr.mxu0 0.0
    %2467 = vmatpush1.msra.mxu0 0.0
    %2468 = vmatprep.subr.mxu0 0.0
    %2469 = vmatpush1.msra.mxu0 0.0
    %2470 = vmatprep.subr.mxu0 0.0
    %2471 = vmatpush1.msra.mxu0 0.0
    %2472 = vmatprep.subr.mxu0 0.0
    %2473 = vmatpush1.msra.mxu0 0.0
    %2474 = vmatprep.subr.mxu0 0.0
    %2475 = vmatpush1.msra.mxu0 0.0
    %2476 = vmatprep.subr.mxu0 0.0
    %2477 = vmatpush1.msra.mxu0 0.0
    %2478 = vmatprep.mubr.f32.mxu0 0.0
    %2479 = vmatmul.mubr.f32.gmra.mrb[0].mxu0 %v1469
    %v2480 = vpop.f32.mrb[0].mxu0
    %v2481 = vadd.f32 %v2411, %v2480
    %v2482 = vpop.f32.mrb[0].mxu0
    %2483 = vdwg.mxu0
    %v2484 = vmax.f32 %v2481, 0.0
    %2485 = vst [vmem:[%s13] sm:$0xff] %v2202
    %2486 = vst [vmem:[%s13 + $0x8] sm:$0xff] %v2203
    %2487 = vst [vmem:[%s14] sm:$0xff] %v1898
    %2488 = vst [vmem:[%s14 + $0x8] sm:$0xff] %v1899
    %2489 = vst [vmem:[%s14 + $0x10] sm:$0xff] %v1900
    %2490 = vst [vmem:[%s14 + $0x18] sm:$0xff] %v1901
    %2491 = vst [vmem:[#allocation2] sm:$0x3] %v2484
    // Predicated region
    $region54: #{_gn_forward.1} parent=1 // pred_check
      _
    $region55: #{_gn_forward.1} parent=1 // pred_check_branch
      %2493 = sbr.rel (0) target = $region57
    $region56: #{_gn_forward.1} parent=1 // pred_region
      _
    $region57: #{_gn_forward.1} parent=1 // pred_fallthru
      _
    // Predicated region
    $region58: #{_gn_forward.1} parent=1 // pred_check
      _
    $region59: #{_gn_forward.1} parent=1 // pred_check_branch
      %2495 = sbr.rel (0) target = $region61
    $region60: #{_gn_forward.1} parent=1 // pred_region
      _
    $region61: #{_gn_forward.1} parent=1 // pred_fallthru
      _
    // Predicated region
    $region62: #{_gn_forward.1} parent=1 // pred_check
      _
    $region63: #{_gn_forward.1} parent=1 // pred_check_branch
      %2497 = sbr.rel (0) target = $region65
    $region64: #{_gn_forward.1} parent=1 // pred_region
      %s2499 = ssub.s32 32, 32
      %2500 = vsyncadd [#allocation3], %s2499
      %s2502 = sshll.u32 [#allocation2], 4
      %s2503 = int_to_ptr.vmem [resolvable:$true] %s2502
      %2505 = dma.vmem_to_hbm [thread:$0]  %s2503, 32, %s15, [#allocation3]
    $region65: #{_gn_forward.1} parent=1 // pred_fallthru
      _
    // Predicated region
    $region66: #{_gn_forward.1} parent=1 // pred_check
      _
    $region67: #{_gn_forward.1} parent=1 // pred_check_branch
      %2507 = sbr.rel (0) target = $region69
    $region68: #{_gn_forward.1} parent=1 // pred_region
      _
    $region69: #{_gn_forward.1} parent=1 // pred_fallthru
      _
    // Predicated region
    $region70: #{_gn_forward.1} parent=1 // pred_check
      _
    $region71: #{_gn_forward.1} parent=1 // pred_check_branch
      %2509 = sbr.rel (0) target = $region73
    $region72: #{_gn_forward.1} parent=1 // pred_region
      _
    $region73: #{_gn_forward.1} parent=1 // pred_fallthru
      _
    // Predicated region
    $region74: #{_gn_forward.1} parent=1 // pred_check
      _
    $region75: #{_gn_forward.1} parent=1 // pred_check_branch
      %2511 = sbr.rel (0) target = $region77
    $region76: #{_gn_forward.1} parent=1 // pred_region
      %2512 = dma.done [#allocation3], 32
    $region77: #{_gn_forward.1} parent=1 // pred_fallthru
      _
    %2513 = vsyncpa [#allocation3], 1

</llo_original>
